<compile_context>
chip_gen: v7x
topology: tpu7x:2x2x1
jax: 0.10.0
libtpu: 0.0.40
codegen_flags: <defaults>
</compile_context>

<pallas_src>
import functools

import jax
import jax.numpy as jnp
from jax.experimental import pallas as pl
from jax.experimental.pallas import tpu as pltpu

NEG = -1e30   # Python float -> lowers as a literal inside the kernel (no captured constants)


# ------------------------------ fused kernel ---------------------------------

def discriminator_kernel(ids_ref,       # scalar prefetch: (B*S,) int32 in SMEM
                         emb_ref,       # (V1p, D)      f32   embedding table (rows padded to x8)
                         convw_ref,     # (f_max*D, NT) bf16  merged im2col conv weights
                         convb_ref,     # (1, NT)       f32   merged conv bias
                         vlen_ref,      # (1, NT)       int32 per-lane valid conv length S-f+1
                         hww_ref,       # (NT, NT)      bf16
                         hwb_ref,       # (1, NT)       f32
                         fcw_ref,       # (NT, Cp)      bf16  (padded class lanes are zero)
                         fcb_ref,       # (1, Cp)       f32   (padded class lanes are NEG)
                         feat_ref,      # (bb, NTp)     f32   out (lane-dense, padded)
                         score_ref,     # (bb, Cp)      f32   out (padded)
                         logp_ref,      # (bb, Cp)      f32   out (padded)
                         win_scr,       # (bb*S, f_max*D) f32 scratch: im2col window slab
                         *, seq_len, vocab_rows):
    S = seq_len
    D = emb_ref.shape[1]
    f_max = convw_ref.shape[0] // D
    NT = convw_ref.shape[1]
    BSb = win_scr.shape[0]
    bb = BSb // S
    NTp = feat_ref.shape[1]

    base = pl.program_id(0) * BSb

    # ---- embedding gather written straight into the im2col window slab ----
    # window row p, lane block r holds the embedding of the token at flat row (p + r) mod BSb;
    # wrapped / cross-sequence rows only land in positions that are later masked or multiply
    # zero-padded weight rows, so they never affect the result.
    def gather_body(q, carry):
        tok = jnp.clip(ids_ref[base + q], 0, vocab_rows - 1)     # clamp like jnp.take
        row = emb_ref[pl.ds(tok, 1), :]                          # (1, D)
        for r in range(f_max):
            p = q if r == 0 else (q + (BSb - r)) % BSb
            win_scr[pl.ds(p, 1), r * D:(r + 1) * D] = row
        return carry

    jax.lax.fori_loop(0, BSb, gather_body, 0)

    # ---- ALL conv branches as one MXU matmul (bf16 in, f32 accum) ----
    win = win_scr[...].astype(jnp.bfloat16)                      # (BSb, f_max*D)
    conv = jnp.dot(win, convw_ref[...], preferred_element_type=jnp.float32)
    conv = (conv + convb_ref[...]).reshape(bb, S, NT)            # rows stay 8-aligned (S=8)

    pos = jax.lax.broadcasted_iota(jnp.int32, (bb, S, 1), 1)
    conv = jnp.where(pos < vlen_ref[...], conv, NEG)             # mask invalid positions per lane
    pooled = jnp.max(conv, axis=1)                               # max-pool over sequence
    pred = jnp.maximum(pooled, 0.0)                              # relu(max) == max(relu)

    # ---- highway + (eval-mode) dropout + fc + log_softmax ----
    h = jnp.dot(pred.astype(jnp.bfloat16), hww_ref[...],
                preferred_element_type=jnp.float32) + hwb_ref[...]
    sig = jax.nn.sigmoid(h)
    highway = sig * jnp.maximum(h, 0.0) + (1.0 - sig) * pred
    # TODO(synk): nn.Dropout is identity here (eval semantics); training-mode masking is not done.

    if NTp > NT:                                                 # lane-dense full-width store
        feat_ref[...] = jnp.concatenate(
            [highway, jnp.zeros((bb, NTp - NT), jnp.float32)], axis=1)
    else:
        feat_ref[...] = highway

    score = jnp.dot(highway.astype(jnp.bfloat16), fcw_ref[...],
                    preferred_element_type=jnp.float32) + fcb_ref[...]
    score_ref[...] = score                                       # padded lanes hold ~NEG
    m = jnp.max(score, axis=1, keepdims=True)
    z = score - m
    lse = jnp.log(jnp.sum(jnp.exp(z), axis=1, keepdims=True))    # padded lanes exp() -> 0
    logp_ref[...] = z - lse                                      # log_softmax


# ------------------------------- wrapper --------------------------------------

def _pick_batch_block(B, S):
    cap = max(8, 256 // S)                       # aim for >=256 rows per grid step
    for cand in range(min(B, cap), 0, -1):
        if B % cand == 0 and (cand % 8 == 0 or cand == B):
            return cand
    return B


def discriminator_forward(x, params, *, seq_len, filter_sizes, num_filters, num_classes,
                          batch_block=None):
    """Returns {'pred': log_softmax(score), 'feature': highway features, 'score': logits}."""
    B, S = x.shape
    assert S == seq_len
    V1, D = params["emb"].shape
    f_max = max(filter_sizes)
    NT = sum(num_filters)
    NTp = ((NT + 127) // 128) * 128              # lane-dense feature slab
    Cp = ((num_classes + 127) // 128) * 128      # lane-dense class slab

    if batch_block is None:
        batch_block = _pick_batch_block(B, S)
    assert B % batch_block == 0
    grid = (B // batch_block,)

    ids = x.reshape(B * S).astype(jnp.int32)     # scalar-prefetched into SMEM

    # embedding table: rows padded to a multiple of 8 sublanes
    V1p = ((V1 + 7) // 8) * 8
    emb_tab = jnp.zeros((V1p, D), jnp.float32).at[:V1].set(params["emb"].astype(jnp.float32))

    # merged im2col conv weights / bias / per-lane valid length
    w_cols, b_cols, vlen_cols = [], [], []
    for i, (f, nf) in enumerate(zip(filter_sizes, num_filters)):
        w = params["conv_w"][i].reshape(f * D, nf).astype(jnp.float32)
        w_cols.append(jnp.zeros((f_max * D, nf), jnp.float32).at[:f * D, :].set(w))
        b_cols.append(params["conv_b"][i].reshape(1, nf).astype(jnp.float32))
        vlen_cols.append(jnp.full((1, nf), S - f + 1, jnp.int32))
    conv_w_all = jnp.concatenate(w_cols, axis=1).astype(jnp.bfloat16)    # (f_max*D, NT)
    conv_b_all = jnp.concatenate(b_cols, axis=1)                         # (1, NT)
    vlen = jnp.concatenate(vlen_cols, axis=1)                            # (1, NT)

    hw_w = params["hw_w"].astype(jnp.bfloat16)
    hw_b = params["hw_b"].reshape(1, NT).astype(jnp.float32)
    fc_w_pad = (jnp.zeros((NT, Cp), jnp.float32)
                .at[:, :num_classes].set(params["fc_w"]).astype(jnp.bfloat16))
    fc_b_pad = (jnp.full((1, Cp), NEG, dtype=jnp.float32)
                .at[:, :num_classes].set(params["fc_b"].reshape(1, num_classes)))

    def wspec(shape):          # resident weights: constant block index
        return pl.BlockSpec(shape, lambda i, ids_ref: (0, 0))

    def ospec(shape):          # outputs: blocked over the batch grid axis
        return pl.BlockSpec(shape, lambda i, ids_ref: (i, 0))

    grid_spec = pltpu.PrefetchScalarGridSpec(
        num_scalar_prefetch=1,
        grid=grid,
        in_specs=[wspec((V1p, D)),
                  wspec((f_max * D, NT)), wspec((1, NT)), wspec((1, NT)),
                  wspec((NT, NT)), wspec((1, NT)),
                  wspec((NT, Cp)), wspec((1, Cp))],
        out_specs=(ospec((batch_block, NTp)),
                   ospec((batch_block, Cp)),
                   ospec((batch_block, Cp))),
        scratch_shapes=[pltpu.VMEM((batch_block * S, f_max * D), jnp.float32)],
    )

    kernel = functools.partial(discriminator_kernel, seq_len=seq_len, vocab_rows=V1)

    feat_p, score_p, logp_p = pl.pallas_call(
        kernel,
        out_shape=(jax.ShapeDtypeStruct((B, NTp), jnp.float32),
                   jax.ShapeDtypeStruct((B, Cp), jnp.float32),
                   jax.ShapeDtypeStruct((B, Cp), jnp.float32)),
        grid_spec=grid_spec,
        compiler_params=pltpu.CompilerParams(dimension_semantics=("parallel",)),
    )(ids, emb_tab, conv_w_all, conv_b_all, vlen, hw_w, hw_b, fc_w_pad, fc_b_pad)

    return {"pred": logp_p[:, :num_classes],
            "feature": feat_p[:, :NT],
            "score": score_p[:, :num_classes]}


# --------------------------- pure-JAX reference -------------------------------

def reference_forward(x, params, *, seq_len, filter_sizes, num_filters):
    emb = jnp.take(params["emb"], x, axis=0).astype(jnp.float32)
    B = x.shape[0]
    pooled = []
    for i, (f, nf) in enumerate(zip(filter_sizes, num_filters)):
        L = seq_len - f + 1
        acc = jnp.zeros((B, L, nf), jnp.float32)
        for r in range(f):
            acc = acc + jnp.einsum("bld,dn->bln", emb[:, r:r + L, :], params["conv_w"][i][r])
        acc = jax.nn.relu(acc + params["conv_b"][i][0])
        pooled.append(jnp.max(acc, axis=1))
    pred = jnp.concatenate(pooled, axis=1)
    h = pred @ params["hw_w"] + params["hw_b"][0]
    sig = jax.nn.sigmoid(h)
    highway = sig * jax.nn.relu(h) + (1.0 - sig) * pred
    score = highway @ params["fc_w"] + params["fc_b"][0]
    logp = jax.nn.log_softmax(score, axis=1)
    return {"pred": logp, "feature": highway, "score": score}


# ---------------------------------- main --------------------------------------

if __name__ == "__main__":
    # Small, module-consistent hyperparameters.  batch=64 with batch_block=32 gives
    # 256 token rows per grid step and a 2-step "parallel" grid.
    seq_len = 8
    num_classes = 2
    vocab_size = 20
    dis_emb_dim = 32
    filter_sizes = [2, 3]
    num_filters = [16, 16]
    batch = 64
    num_filters_total = sum(num_filters)

    key = jax.random.PRNGKey(0)
    keys = jax.random.split(key, 12)

    # Deterministic synthetic parameters (PyTorch Linear/Conv weights stored pre-transposed
    # into "input-dim -> output-dim" layout so the kernel does plain x @ W + b).
    params = {
        "emb": 0.1 * jax.random.normal(keys[0], (vocab_size + 1, dis_emb_dim), jnp.float32),
        "conv_w": [0.1 * jax.random.normal(keys[1 + i], (f, dis_emb_dim, nf), jnp.float32)
                   for i, (f, nf) in enumerate(zip(filter_sizes, num_filters))],
        "conv_b": [0.1 * jax.random.normal(keys[4 + i], (1, nf), jnp.float32)
                   for i, (_, nf) in enumerate(zip(filter_sizes, num_filters))],
        "hw_w": 0.1 * jax.random.normal(keys[7], (num_filters_total, num_filters_total), jnp.float32),
        "hw_b": 0.1 * jax.random.normal(keys[8], (1, num_filters_total), jnp.float32),
        "fc_w": 0.1 * jax.random.normal(keys[9], (num_filters_total, num_classes), jnp.float32),
        "fc_b": 0.1 * jax.random.normal(keys[10], (1, num_classes), jnp.float32),
    }

    x = jax.random.randint(keys[11], (batch, seq_len), 0, vocab_size + 1, dtype=jnp.int32)

    out = discriminator_forward(
        x, params,
        seq_len=seq_len, filter_sizes=filter_sizes,
        num_filters=num_filters, num_classes=num_classes,
        batch_block=32)
    jax.block_until_ready(out)

    ref = reference_forward(x, params, seq_len=seq_len,
                            filter_sizes=filter_sizes, num_filters=num_filters)
    # bf16 matmul weights in the kernel vs f32 reference -> loosened tolerances.
    for k in ("pred", "feature", "score"):
        assert out[k].shape == ref[k].shape, (k, out[k].shape, ref[k].shape)
        assert jnp.allclose(out[k], ref[k], atol=3e-2, rtol=3e-2), k

    print("KERNEL_OK")
</pallas_src>

<mosaic_0001>
module attributes {stable_mosaic.version = 11 : i64} {
  func.func @discriminator_kernel(%arg0: i32, %arg1: memref<512xi32, #tpu.memory_space<smem>>, %arg2: memref<24x32xf32, #tpu.memory_space<vmem>>, %arg3: memref<96x32xbf16, #tpu.memory_space<vmem>>, %arg4: memref<1x32xf32, #tpu.memory_space<vmem>>, %arg5: memref<1x32xi32, #tpu.memory_space<vmem>>, %arg6: memref<32x32xbf16, #tpu.memory_space<vmem>>, %arg7: memref<1x32xf32, #tpu.memory_space<vmem>>, %arg8: memref<32x128xbf16, #tpu.memory_space<vmem>>, %arg9: memref<1x128xf32, #tpu.memory_space<vmem>>, %arg10: memref<32x128xf32, #tpu.memory_space<vmem>>, %arg11: memref<32x128xf32, #tpu.memory_space<vmem>>, %arg12: memref<32x128xf32, #tpu.memory_space<vmem>>, %arg13: memref<256x96xf32, #tpu.memory_space<vmem>>) attributes {dimension_semantics = [#tpu.dimension_semantics<parallel>], iteration_bounds = array<i64: 2>, scalar_prefetch = 1 : i64, scratch_operands = 1 : i64, tpu.core_type = #tpu.core_type<tc>, window_params = [{pipeline_mode = #tpu.pipeline_mode<synchronous>, transform_indices = @transform_0, window_bounds = array<i64: 24, 32>}, {pipeline_mode = #tpu.pipeline_mode<synchronous>, transform_indices = @transform_1, window_bounds = array<i64: 96, 32>}, {pipeline_mode = #tpu.pipeline_mode<synchronous>, transform_indices = @transform_2, window_bounds = array<i64: 1, 32>}, {pipeline_mode = #tpu.pipeline_mode<synchronous>, transform_indices = @transform_3, window_bounds = array<i64: 1, 32>}, {pipeline_mode = #tpu.pipeline_mode<synchronous>, transform_indices = @transform_4, window_bounds = array<i64: 32, 32>}, {pipeline_mode = #tpu.pipeline_mode<synchronous>, transform_indices = @transform_5, window_bounds = array<i64: 1, 32>}, {pipeline_mode = #tpu.pipeline_mode<synchronous>, transform_indices = @transform_6, window_bounds = array<i64: 32, 128>}, {pipeline_mode = #tpu.pipeline_mode<synchronous>, transform_indices = @transform_7, window_bounds = array<i64: 1, 128>}, {transform_indices = @transform_8, window_bounds = array<i64: 32, 128>}, {transform_indices = @transform_9, window_bounds = array<i64: 32, 128>}, {transform_indices = @transform_10, window_bounds = array<i64: 32, 128>}]} {
    %c256_i32 = arith.constant 256 : i32
    %0 = arith.muli %arg0, %c256_i32 : i32
    %c0_i32 = arith.constant 0 : i32
    %c256_i32_0 = arith.constant 256 : i32
    %1 = arith.addi %c0_i32, %c256_i32_0 : i32
    %c1_i32 = arith.constant 1 : i32
    scf.for %arg14 = %c0_i32 to %1 step %c1_i32  : i32 {
      %60 = arith.addi %0, %arg14 : i32
      %61 = arith.index_cast %60 : i32 to index
      %62 = memref.load %arg1[%61] : memref<512xi32, #tpu.memory_space<smem>>
      %c0_i32_34 = arith.constant 0 : i32
      %c20_i32 = arith.constant 20 : i32
      %63 = arith.maxsi %c0_i32_34, %62 : i32
      %64 = arith.minsi %c20_i32, %63 : i32
      %65 = arith.index_cast %64 : i32 to index
      %c0_35 = arith.constant 0 : index
      %66 = vector.load %arg2[%65, %c0_35] : memref<24x32xf32, #tpu.memory_space<vmem>>, vector<1x32xf32>
      %67 = arith.index_cast %arg14 : i32 to index
      %c0_36 = arith.constant 0 : index
      %68 = vector.load %arg13[%67, %c0_36] : memref<256x96xf32, #tpu.memory_space<vmem>>, vector<1x32xf32>
      tpu.vector_store %arg13[%67, %c0_36], %66 {strides = array<i32>} : memref<256x96xf32, #tpu.memory_space<vmem>>, vector<1x32xf32>,
      %c255_i32 = arith.constant 255 : i32
      %69 = arith.addi %arg14, %c255_i32 : i32
      %c256_i32_37 = arith.constant 256 : i32
      %c0_i32_38 = arith.constant 0 : i32
      %70 = arith.cmpi eq, %c256_i32_37, %c0_i32_38 : i32
      %c1_i32_39 = arith.constant 1 : i32
      %71 = arith.select %70, %c1_i32_39, %c256_i32_37 : i32
      %72 = arith.remsi %69, %71 : i32
      %c0_i32_40 = arith.constant 0 : i32
      %73 = arith.cmpi ne, %72, %c0_i32_40 : i32
      %c0_i32_41 = arith.constant 0 : i32
      %74 = arith.cmpi slt, %72, %c0_i32_41 : i32
      %c0_i32_42 = arith.constant 0 : i32
      %75 = arith.cmpi slt, %71, %c0_i32_42 : i32
      %76 = arith.xori %74, %75 : i1
      %77 = arith.andi %76, %73 : i1
      %78 = arith.addi %72, %71 : i32
      %79 = arith.select %77, %78, %72 : i32
      %80 = arith.index_cast %79 : i32 to index
      %c32 = arith.constant 32 : index
      %81 = vector.load %arg13[%80, %c32] : memref<256x96xf32, #tpu.memory_space<vmem>>, vector<1x32xf32>
      tpu.vector_store %arg13[%80, %c32], %66 {strides = array<i32>} : memref<256x96xf32, #tpu.memory_space<vmem>>, vector<1x32xf32>,
      %c254_i32 = arith.constant 254 : i32
      %82 = arith.addi %arg14, %c254_i32 : i32
      %c256_i32_43 = arith.constant 256 : i32
      %c0_i32_44 = arith.constant 0 : i32
      %83 = arith.cmpi eq, %c256_i32_43, %c0_i32_44 : i32
      %c1_i32_45 = arith.constant 1 : i32
      %84 = arith.select %83, %c1_i32_45, %c256_i32_43 : i32
      %85 = arith.remsi %82, %84 : i32
      %c0_i32_46 = arith.constant 0 : i32
      %86 = arith.cmpi ne, %85, %c0_i32_46 : i32
      %c0_i32_47 = arith.constant 0 : i32
      %87 = arith.cmpi slt, %85, %c0_i32_47 : i32
      %c0_i32_48 = arith.constant 0 : i32
      %88 = arith.cmpi slt, %84, %c0_i32_48 : i32
      %89 = arith.xori %87, %88 : i1
      %90 = arith.andi %89, %86 : i1
      %91 = arith.addi %85, %84 : i32
      %92 = arith.select %90, %91, %85 : i32
      %93 = arith.index_cast %92 : i32 to index
      %c64 = arith.constant 64 : index
      %94 = vector.load %arg13[%93, %c64] : memref<256x96xf32, #tpu.memory_space<vmem>>, vector<1x32xf32>
      tpu.vector_store %arg13[%93, %c64], %66 {strides = array<i32>} : memref<256x96xf32, #tpu.memory_space<vmem>>, vector<1x32xf32>,
    }
    %c256_i32_1 = arith.constant 256 : i32
    %c0 = arith.constant 0 : index
    %c0_2 = arith.constant 0 : index
    %2 = vector.load %arg13[%c0, %c0_2] : memref<256x96xf32, #tpu.memory_space<vmem>>, vector<256x96xf32>
    %3 = arith.truncf %2 : vector<256x96xf32> to vector<256x96xbf16>
    %c0_3 = arith.constant 0 : index
    %c0_4 = arith.constant 0 : index
    %4 = vector.load %arg3[%c0_3, %c0_4] : memref<96x32xbf16, #tpu.memory_space<vmem>>, vector<96x32xbf16>
    %cst = arith.constant dense<0.000000e+00> : vector<256x32xf32>
    %5 = tpu.matmul %3, %4, %cst {dimension_numbers = #tpu.dot_dimension_numbers<[1], [0], [0], [1], [0, 0, 1, 1], [], []>} : vector<256x96xbf16>, vector<96x32xbf16>, vector<256x32xf32> -> vector<256x32xf32>
    %c0_5 = arith.constant 0 : index
    %c0_6 = arith.constant 0 : index
    %6 = vector.load %arg4[%c0_5, %c0_6] : memref<1x32xf32, #tpu.memory_space<vmem>>, vector<1x32xf32>
    %7 = vector.broadcast %6 : vector<1x32xf32> to vector<256x32xf32>
    %8 = arith.addf %5, %7 : vector<256x32xf32>
    %9 = vector.shape_cast %8 : vector<256x32xf32> to vector<32x8x32xf32>
    %10 = tpu.iota {dimensions = array<i32: 1>} : vector<32x8x1xi32>
    %c0_7 = arith.constant 0 : index
    %c0_8 = arith.constant 0 : index
    %11 = vector.load %arg5[%c0_7, %c0_8] : memref<1x32xi32, #tpu.memory_space<vmem>>, vector<1x32xi32>
    %12 = vector.shape_cast %11 : vector<1x32xi32> to vector<1x1x32xi32>
    %13 = vector.broadcast %10 : vector<32x8x1xi32> to vector<32x8x32xi32>
    %14 = vector.broadcast %12 : vector<1x1x32xi32> to vector<32x8x32xi32>
    %15 = arith.cmpi slt, %13, %14 : vector<32x8x32xi32>
    %cst_9 = arith.constant -1.000000e+30 : f32
    %16 = vector.broadcast %cst_9 : f32 to vector<32x8x32xf32>
    %17 = arith.select %15, %9, %16 : vector<32x8x32xi1>, vector<32x8x32xf32>
    %cst_10 = arith.constant dense<0xFF800000> : vector<32x32xf32>
    %18 = vector.multi_reduction <maximumf>, %17, %cst_10 [1] : vector<32x8x32xf32> to vector<32x32xf32>
    %cst_11 = arith.constant 0.000000e+00 : f32
    %19 = vector.broadcast %cst_11 : f32 to vector<32x32xf32>
    %20 = arith.maximumf %18, %19 : vector<32x32xf32>
    %21 = arith.truncf %20 : vector<32x32xf32> to vector<32x32xbf16>
    %c0_12 = arith.constant 0 : index
    %c0_13 = arith.constant 0 : index
    %22 = vector.load %arg6[%c0_12, %c0_13] : memref<32x32xbf16, #tpu.memory_space<vmem>>, vector<32x32xbf16>
    %cst_14 = arith.constant dense<0.000000e+00> : vector<32x32xf32>
    %23 = tpu.matmul %21, %22, %cst_14 {dimension_numbers = #tpu.dot_dimension_numbers<[1], [0], [0], [1], [0, 0, 1, 1], [], []>} : vector<32x32xbf16>, vector<32x32xbf16>, vector<32x32xf32> -> vector<32x32xf32>
    %c0_15 = arith.constant 0 : index
    %c0_16 = arith.constant 0 : index
    %24 = vector.load %arg7[%c0_15, %c0_16] : memref<1x32xf32, #tpu.memory_space<vmem>>, vector<1x32xf32>
    %25 = vector.broadcast %24 : vector<1x32xf32> to vector<32x32xf32>
    %26 = arith.addf %23, %25 : vector<32x32xf32>
    %27 = arith.negf %26 : vector<32x32xf32>
    %28 = math.exp %27 : vector<32x32xf32>
    %cst_17 = arith.constant 1.000000e+00 : f32
    %29 = vector.broadcast %cst_17 : f32 to vector<32x32xf32>
    %30 = arith.addf %29, %28 : vector<32x32xf32>
    %31 = arith.divf %29, %30 : vector<32x32xf32>
    %cst_18 = arith.constant 0.000000e+00 : f32
    %32 = vector.broadcast %cst_18 : f32 to vector<32x32xf32>
    %33 = arith.maximumf %26, %32 : vector<32x32xf32>
    %34 = arith.mulf %31, %33 : vector<32x32xf32>
    %cst_19 = arith.constant 1.000000e+00 : f32
    %35 = vector.broadcast %cst_19 : f32 to vector<32x32xf32>
    %36 = arith.subf %35, %31 : vector<32x32xf32>
    %37 = arith.mulf %36, %20 : vector<32x32xf32>
    %38 = arith.addf %34, %37 : vector<32x32xf32>
    %cst_20 = arith.constant 0.000000e+00 : f32
    %39 = vector.broadcast %cst_20 : f32 to vector<32x96xf32>
    %40 = tpu.concatenate %38, %39 in 1 : vector<32x32xf32>, vector<32x96xf32> -> vector<32x128xf32>
    %c0_21 = arith.constant 0 : index
    %c0_22 = arith.constant 0 : index
    %41 = vector.load %arg10[%c0_21, %c0_22] : memref<32x128xf32, #tpu.memory_space<vmem>>, vector<32x128xf32>
    tpu.vector_store %arg10[%c0_21, %c0_22], %40 {strides = array<i32>} : memref<32x128xf32, #tpu.memory_space<vmem>>, vector<32x128xf32>,
    %42 = arith.truncf %38 : vector<32x32xf32> to vector<32x32xbf16>
    %c0_23 = arith.constant 0 : index
    %c0_24 = arith.constant 0 : index
    %43 = vector.load %arg8[%c0_23, %c0_24] : memref<32x128xbf16, #tpu.memory_space<vmem>>, vector<32x128xbf16>
    %cst_25 = arith.constant dense<0.000000e+00> : vector<32x128xf32>
    %44 = tpu.matmul %42, %43, %cst_25 {dimension_numbers = #tpu.dot_dimension_numbers<[1], [0], [0], [1], [0, 0, 1, 1], [], []>} : vector<32x32xbf16>, vector<32x128xbf16>, vector<32x128xf32> -> vector<32x128xf32>
    %c0_26 = arith.constant 0 : index
    %c0_27 = arith.constant 0 : index
    %45 = vector.load %arg9[%c0_26, %c0_27] : memref<1x128xf32, #tpu.memory_space<vmem>>, vector<1x128xf32>
    %46 = vector.broadcast %45 : vector<1x128xf32> to vector<32x128xf32>
    %47 = arith.addf %44, %46 : vector<32x128xf32>
    %c0_28 = arith.constant 0 : index
    %c0_29 = arith.constant 0 : index
    %48 = vector.load %arg11[%c0_28, %c0_29] : memref<32x128xf32, #tpu.memory_space<vmem>>, vector<32x128xf32>
    tpu.vector_store %arg11[%c0_28, %c0_29], %47 {strides = array<i32>} : memref<32x128xf32, #tpu.memory_space<vmem>>, vector<32x128xf32>,
    %cst_30 = arith.constant dense<0xFF800000> : vector<32xf32>
    %49 = vector.multi_reduction <maximumf>, %47, %cst_30 [1] : vector<32x128xf32> to vector<32xf32>
    %50 = vector.shape_cast %49 : vector<32xf32> to vector<32x1xf32>
    %51 = vector.broadcast %50 : vector<32x1xf32> to vector<32x128xf32>
    %52 = arith.subf %47, %51 : vector<32x128xf32>
    %53 = math.exp %52 : vector<32x128xf32>
    %cst_31 = arith.constant dense<0.000000e+00> : vector<32xf32>
    %54 = vector.multi_reduction <add>, %53, %cst_31 [1] : vector<32x128xf32> to vector<32xf32>
    %55 = vector.shape_cast %54 : vector<32xf32> to vector<32x1xf32>
    %56 = math.log %55 : vector<32x1xf32>
    %57 = vector.broadcast %56 : vector<32x1xf32> to vector<32x128xf32>
    %58 = arith.subf %52, %57 : vector<32x128xf32>
    %c0_32 = arith.constant 0 : index
    %c0_33 = arith.constant 0 : index
    %59 = vector.load %arg12[%c0_32, %c0_33] : memref<32x128xf32, #tpu.memory_space<vmem>>, vector<32x128xf32>
    tpu.vector_store %arg12[%c0_32, %c0_33], %58 {strides = array<i32>} : memref<32x128xf32, #tpu.memory_space<vmem>>, vector<32x128xf32>,
    return
  }
  func.func @transform_0(%arg0: i32, %arg1: memref<512xi32, #tpu.memory_space<smem>>) -> (i32, i32) {
    %c0_i32 = arith.constant 0 : i32
    %c0_i32_0 = arith.constant 0 : i32
    %c0_i32_1 = arith.constant 0 : i32
    return %c0_i32, %c0_i32_0 : i32, i32
  }
  func.func @transform_1(%arg0: i32, %arg1: memref<512xi32, #tpu.memory_space<smem>>) -> (i32, i32) {
    %c0_i32 = arith.constant 0 : i32
    %c0_i32_0 = arith.constant 0 : i32
    %c0_i32_1 = arith.constant 0 : i32
    return %c0_i32, %c0_i32_0 : i32, i32
  }
  func.func @transform_2(%arg0: i32, %arg1: memref<512xi32, #tpu.memory_space<smem>>) -> (i32, i32) {
    %c0_i32 = arith.constant 0 : i32
    %c0_i32_0 = arith.constant 0 : i32
    %c0_i32_1 = arith.constant 0 : i32
    return %c0_i32, %c0_i32_0 : i32, i32
  }
  func.func @transform_3(%arg0: i32, %arg1: memref<512xi32, #tpu.memory_space<smem>>) -> (i32, i32) {
    %c0_i32 = arith.constant 0 : i32
    %c0_i32_0 = arith.constant 0 : i32
    %c0_i32_1 = arith.constant 0 : i32
    return %c0_i32, %c0_i32_0 : i32, i32
  }
  func.func @transform_4(%arg0: i32, %arg1: memref<512xi32, #tpu.memory_space<smem>>) -> (i32, i32) {
    %c0_i32 = arith.constant 0 : i32
    %c0_i32_0 = arith.constant 0 : i32
    %c0_i32_1 = arith.constant 0 : i32
    return %c0_i32, %c0_i32_0 : i32, i32
  }
  func.func @transform_5(%arg0: i32, %arg1: memref<512xi32, #tpu.memory_space<smem>>) -> (i32, i32) {
    %c0_i32 = arith.constant 0 : i32
    %c0_i32_0 = arith.constant 0 : i32
    %c0_i32_1 = arith.constant 0 : i32
    return %c0_i32, %c0_i32_0 : i32, i32
  }
  func.func @transform_6(%arg0: i32, %arg1: memref<512xi32, #tpu.memory_space<smem>>) -> (i32, i32) {
    %c0_i32 = arith.constant 0 : i32
    %c0_i32_0 = arith.constant 0 : i32
    %c0_i32_1 = arith.constant 0 : i32
    return %c0_i32, %c0_i32_0 : i32, i32
  }
  func.func @transform_7(%arg0: i32, %arg1: memref<512xi32, #tpu.memory_space<smem>>) -> (i32, i32) {
    %c0_i32 = arith.constant 0 : i32
    %c0_i32_0 = arith.constant 0 : i32
    %c0_i32_1 = arith.constant 0 : i32
    return %c0_i32, %c0_i32_0 : i32, i32
  }
  func.func @transform_8(%arg0: i32, %arg1: memref<512xi32, #tpu.memory_space<smem>>) -> (i32, i32) {
    %c0_i32 = arith.constant 0 : i32
    %c0_i32_0 = arith.constant 0 : i32
    return %arg0, %c0_i32 : i32, i32
  }
  func.func @transform_9(%arg0: i32, %arg1: memref<512xi32, #tpu.memory_space<smem>>) -> (i32, i32) {
    %c0_i32 = arith.constant 0 : i32
    %c0_i32_0 = arith.constant 0 : i32
    return %arg0, %c0_i32 : i32, i32
  }
  func.func @transform_10(%arg0: i32, %arg1: memref<512xi32, #tpu.memory_space<smem>>) -> (i32, i32) {
    %c0_i32 = arith.constant 0 : i32
    %c0_i32_0 = arith.constant 0 : i32
    return %arg0, %c0_i32 : i32, i32
  }
}

</mosaic_0001>

<llo_original>
// kernel: tpu_custom_call.1
$region0: #{tpu_custom_call.1}
  #allocation0 [shape = 'u32[]', space=smem, size = 0x4, offset = 0x4, fixed_abs, tag = 'smem constant byte address 0x4 - core index']
  #allocation1 [shape = 'u32[144,128]{1,0:T(1,128)}', space=vmem, size = 0x12000, scoped, tag = 'internal scratch']
  #allocation2 [shape = 'f32[256,96]{1,0:T(8,128)}', space=vmem, size = 0x20000, scoped, tag = 'scratch operand']
  #allocation3 [shape = 's32[1]{0}', space=sflag, size = 0x4, scoped, tag = 'scoped memory for tpu_custom_call.1']
  #allocation4 [shape = 'u8[2048]{0}', space=smem, size = 0x800, scoped, tag = 'prefetched SMEM operand 0']
  %s0 = inlined_call_operand.vmem [shape: s32[512], index: 0, kind: input, shape index: {}]
  %s1 = inlined_call_operand.vmem [shape: f32[24,32], index: 1, kind: input, shape index: {}]
  %s2 = inlined_call_operand.vmem [shape: bf16[96,32], index: 2, kind: input, shape index: {}]
  %s3 = inlined_call_operand.vmem [shape: f32[1,32], index: 3, kind: input, shape index: {}]
  %s4 = inlined_call_operand.vmem [shape: s32[1,32], index: 4, kind: input, shape index: {}]
  %s5 = inlined_call_operand.vmem [shape: bf16[32,32], index: 5, kind: input, shape index: {}]
  %s6 = inlined_call_operand.vmem [shape: f32[1,32], index: 6, kind: input, shape index: {}]
  %s7 = inlined_call_operand.vmem [shape: bf16[32,128], index: 7, kind: input, shape index: {}]
  %s8 = inlined_call_operand.vmem [shape: f32[1,128], index: 8, kind: input, shape index: {}]
  %s9 = inlined_call_operand.hbm [shape: f32[64,128], index: 9, kind: output, shape index: {0}]
  %s10 = inlined_call_operand.hbm [shape: f32[64,128], index: 10, kind: output, shape index: {1}]
  %s11 = inlined_call_operand.hbm [shape: f32[64,128], index: 11, kind: output, shape index: {2}]
  %12 = xla_tuple %s9, %s10, %s11
  %s13 = sld [smem:[#allocation0]]
  $region88: #{tpu_custom_call.1} parent=0
    _
  %s15 = ssub.s32 1, %s13
  %s16 = scalar_select 0, %s15, %s13
  %s17 = sshll.u32 %s0, 4
  %s18 = int_to_ptr.vmem [resolvable:$true] %s17
  %20 = dma.vmem_to_smem %s18, 64, [#allocation4], [#allocation3]
  %21 = dma.done [#allocation3], 64
  %22 = sfence
  $region1: #{tpu_custom_call.1} parent=0
    #allocation5 [shape = 'u8[32768]{0}', space=vmem, size = 0x8000, scoped, tag = 'output window, operand 0']
    #allocation6 [shape = 's32[2]{0}', space=sflag, size = 0x8, scoped, tag = 'scoped memory for tpu_custom_call.1']
    #allocation7 [shape = 'u8[32768]{0}', space=vmem, size = 0x8000, scoped, tag = 'output window, operand 1']
    #allocation8 [shape = 's32[2]{0}', space=sflag, size = 0x8, scoped, tag = 'scoped memory for tpu_custom_call.1']
    #allocation9 [shape = 'u8[32768]{0}', space=vmem, size = 0x8000, scoped, tag = 'output window, operand 2']
    %23 = vsyncpa [#allocation6], 0
    %s24 = scalar_lea.sflag [#allocation6], 1
    %25 = vsyncpa %s24, 0
    %26 = vsyncpa [#allocation8], 0
    %s27 = scalar_lea.sflag [#allocation8], 1
    %28 = vsyncpa %s27, 0
    loop: start=0, step=1, limit=4
    $region2: #{tpu_custom_call.1} parent=1 // loop_pre_header
      _
    $region3: #{tpu_custom_call.1} parent=1 // loop_header
      %s30 = sphi 0, %s34
      %p31 = scmp.ge.s32.totalorder %s30, 4
      %s38 = sphi 0, %s38
      %s40 = sphi 0, %s38
      %s41 = sphi 0, %s40
      %s55 = sphi 0, %s41
      %s59 = sphi 0, %s59
      %s61 = sphi 0, %s59
      %s62 = sphi 0, %s61
      %s76 = sphi 0, %s62
      %s80 = sphi 0, %s80
      %s82 = sphi 0, %s80
      %s83 = sphi 0, %s82
      %s97 = sphi 0, %s83
      %s101 = sphi 0, %s101
      %s103 = sphi 0, %s101
      %s104 = sphi 0, %s103
      %s118 = sphi 0, %s104
      %s122 = sphi 0, %s122
      %s124 = sphi 0, %s122
      %s125 = sphi 0, %s124
      %s139 = sphi 0, %s125
      %s143 = sphi 0, %s143
      %s145 = sphi 0, %s143
      %s146 = sphi 0, %s145
      %s160 = sphi 0, %s146
      %s164 = sphi 0, %s164
      %s166 = sphi 0, %s164
      %s167 = sphi 0, %s166
      %s181 = sphi 0, %s167
      %s185 = sphi 0, %s185
      %s187 = sphi 0, %s185
      %s188 = sphi 0, %s187
      %s202 = sphi 0, %s188
      %s208 = sphi 0, %s210
      %s211 = sphi 0, %s208
      %s212 = sphi 0, %s211
      %s228 = sphi 0, %s212
      %s234 = sphi 0, %s236
      %s237 = sphi 0, %s234
      %s238 = sphi 0, %s237
      %s254 = sphi 0, %s238
      %s260 = sphi 0, %s262
      %s263 = sphi 0, %s260
      %s264 = sphi 0, %s263
      %s280 = sphi 0, %s264
    $region4: #{tpu_custom_call.1} parent=1 // loop_header_branch
      %33 = sbr.rel (%p31) target = $region8
    $region5: #{tpu_custom_call.1} parent=1 // loop_body
      %s35 = ssub.s32 %s30, 1
      %s36 = ssub.s32 %s30, 2
      %s37 = sadd.s32 %s30, 1
      %s39 = sadd.s32 %s38, 1
      %p42 = scmp.eq.s32.totalorder %s30, 1
      %p43 = scmp.ne.s32.totalorder %s38, %s40
      %p44 = scmp.eq.s32.totalorder %s30, 0
      %p45 = por %p43, %p44
      %p46 = scmp.ne.s32.totalorder %s38, %s40
      %p47 = scmp.eq.s32.totalorder %s35, 1
      %p48 = por %p46, %p47
      %p49 = scmp.ne.s32.totalorder %s40, %s41
      %p50 = scmp.eq.s32.totalorder %s35, 0
      %p51 = por %p49, %p50
      %p52 = scmp.ne.s32.totalorder %s40, %s41
      %p53 = scmp.eq.s32.totalorder %s36, 1
      %p54 = por %p52, %p53
      %p56 = scmp.ne.s32.totalorder %s41, %s55
      %p57 = scmp.eq.s32.totalorder %s36, 0
      %p58 = por %p56, %p57
      %s60 = sadd.s32 %s59, 1
      %p63 = scmp.eq.s32.totalorder %s30, 1
      %p64 = scmp.ne.s32.totalorder %s59, %s61
      %p65 = scmp.eq.s32.totalorder %s30, 0
      %p66 = por %p64, %p65
      %p67 = scmp.ne.s32.totalorder %s59, %s61
      %p68 = scmp.eq.s32.totalorder %s35, 1
      %p69 = por %p67, %p68
      %p70 = scmp.ne.s32.totalorder %s61, %s62
      %p71 = scmp.eq.s32.totalorder %s35, 0
      %p72 = por %p70, %p71
      %p73 = scmp.ne.s32.totalorder %s61, %s62
      %p74 = scmp.eq.s32.totalorder %s36, 1
      %p75 = por %p73, %p74
      %p77 = scmp.ne.s32.totalorder %s62, %s76
      %p78 = scmp.eq.s32.totalorder %s36, 0
      %p79 = por %p77, %p78
      %s81 = sadd.s32 %s80, 1
      %p84 = scmp.eq.s32.totalorder %s30, 1
      %p85 = scmp.ne.s32.totalorder %s80, %s82
      %p86 = scmp.eq.s32.totalorder %s30, 0
      %p87 = por %p85, %p86
      %p88 = scmp.ne.s32.totalorder %s80, %s82
      %p89 = scmp.eq.s32.totalorder %s35, 1
      %p90 = por %p88, %p89
      %p91 = scmp.ne.s32.totalorder %s82, %s83
      %p92 = scmp.eq.s32.totalorder %s35, 0
      %p93 = por %p91, %p92
      %p94 = scmp.ne.s32.totalorder %s82, %s83
      %p95 = scmp.eq.s32.totalorder %s36, 1
      %p96 = por %p94, %p95
      %p98 = scmp.ne.s32.totalorder %s83, %s97
      %p99 = scmp.eq.s32.totalorder %s36, 0
      %p100 = por %p98, %p99
      %s102 = sadd.s32 %s101, 1
      %p105 = scmp.eq.s32.totalorder %s30, 1
      %p106 = scmp.ne.s32.totalorder %s101, %s103
      %p107 = scmp.eq.s32.totalorder %s30, 0
      %p108 = por %p106, %p107
      %p109 = scmp.ne.s32.totalorder %s101, %s103
      %p110 = scmp.eq.s32.totalorder %s35, 1
      %p111 = por %p109, %p110
      %p112 = scmp.ne.s32.totalorder %s103, %s104
      %p113 = scmp.eq.s32.totalorder %s35, 0
      %p114 = por %p112, %p113
      %p115 = scmp.ne.s32.totalorder %s103, %s104
      %p116 = scmp.eq.s32.totalorder %s36, 1
      %p117 = por %p115, %p116
      %p119 = scmp.ne.s32.totalorder %s104, %s118
      %p120 = scmp.eq.s32.totalorder %s36, 0
      %p121 = por %p119, %p120
      %s123 = sadd.s32 %s122, 1
      %p126 = scmp.eq.s32.totalorder %s30, 1
      %p127 = scmp.ne.s32.totalorder %s122, %s124
      %p128 = scmp.eq.s32.totalorder %s30, 0
      %p129 = por %p127, %p128
      %p130 = scmp.ne.s32.totalorder %s122, %s124
      %p131 = scmp.eq.s32.totalorder %s35, 1
      %p132 = por %p130, %p131
      %p133 = scmp.ne.s32.totalorder %s124, %s125
      %p134 = scmp.eq.s32.totalorder %s35, 0
      %p135 = por %p133, %p134
      %p136 = scmp.ne.s32.totalorder %s124, %s125
      %p137 = scmp.eq.s32.totalorder %s36, 1
      %p138 = por %p136, %p137
      %p140 = scmp.ne.s32.totalorder %s125, %s139
      %p141 = scmp.eq.s32.totalorder %s36, 0
      %p142 = por %p140, %p141
      %s144 = sadd.s32 %s143, 1
      %p147 = scmp.eq.s32.totalorder %s30, 1
      %p148 = scmp.ne.s32.totalorder %s143, %s145
      %p149 = scmp.eq.s32.totalorder %s30, 0
      %p150 = por %p148, %p149
      %p151 = scmp.ne.s32.totalorder %s143, %s145
      %p152 = scmp.eq.s32.totalorder %s35, 1
      %p153 = por %p151, %p152
      %p154 = scmp.ne.s32.totalorder %s145, %s146
      %p155 = scmp.eq.s32.totalorder %s35, 0
      %p156 = por %p154, %p155
      %p157 = scmp.ne.s32.totalorder %s145, %s146
      %p158 = scmp.eq.s32.totalorder %s36, 1
      %p159 = por %p157, %p158
      %p161 = scmp.ne.s32.totalorder %s146, %s160
      %p162 = scmp.eq.s32.totalorder %s36, 0
      %p163 = por %p161, %p162
      %s165 = sadd.s32 %s164, 1
      %p168 = scmp.eq.s32.totalorder %s30, 1
      %p169 = scmp.ne.s32.totalorder %s164, %s166
      %p170 = scmp.eq.s32.totalorder %s30, 0
      %p171 = por %p169, %p170
      %p172 = scmp.ne.s32.totalorder %s164, %s166
      %p173 = scmp.eq.s32.totalorder %s35, 1
      %p174 = por %p172, %p173
      %p175 = scmp.ne.s32.totalorder %s166, %s167
      %p176 = scmp.eq.s32.totalorder %s35, 0
      %p177 = por %p175, %p176
      %p178 = scmp.ne.s32.totalorder %s166, %s167
      %p179 = scmp.eq.s32.totalorder %s36, 1
      %p180 = por %p178, %p179
      %p182 = scmp.ne.s32.totalorder %s167, %s181
      %p183 = scmp.eq.s32.totalorder %s36, 0
      %p184 = por %p182, %p183
      %s186 = sadd.s32 %s185, 1
      %p189 = scmp.eq.s32.totalorder %s30, 1
      %p190 = scmp.ne.s32.totalorder %s185, %s187
      %p191 = scmp.eq.s32.totalorder %s30, 0
      %p192 = por %p190, %p191
      %p193 = scmp.ne.s32.totalorder %s185, %s187
      %p194 = scmp.eq.s32.totalorder %s35, 1
      %p195 = por %p193, %p194
      %p196 = scmp.ne.s32.totalorder %s187, %s188
      %p197 = scmp.eq.s32.totalorder %s35, 0
      %p198 = por %p196, %p197
      %p199 = scmp.ne.s32.totalorder %s187, %s188
      %p200 = scmp.eq.s32.totalorder %s36, 1
      %p201 = por %p199, %p200
      %p203 = scmp.ne.s32.totalorder %s188, %s202
      %p204 = scmp.eq.s32.totalorder %s36, 0
      %p205 = por %p203, %p204
      %s206 = ssub.s32 %s30, %s37
      %p207 = scmp.eq.s32.totalorder %s206, 0
      %s209 = sadd.s32 %s208, 1
      %s210 = scalar_select %p207, %s208, %s209
      %p213 = pneg %p207
      %p214 = scmp.eq.s32.totalorder %s30, 1
      %p215 = por %p213, %p214
      %p216 = scmp.ne.s32.totalorder %s208, %s211
      %p217 = scmp.eq.s32.totalorder %s30, 0
      %p218 = por %p216, %p217
      %p219 = scmp.ne.s32.totalorder %s208, %s211
      %p220 = scmp.eq.s32.totalorder %s35, 1
      %p221 = por %p219, %p220
      %p222 = scmp.ne.s32.totalorder %s211, %s212
      %p223 = scmp.eq.s32.totalorder %s35, 0
      %p224 = por %p222, %p223
      %p225 = scmp.ne.s32.totalorder %s211, %s212
      %p226 = scmp.eq.s32.totalorder %s36, 1
      %p227 = por %p225, %p226
      %p229 = scmp.ne.s32.totalorder %s212, %s228
      %p230 = scmp.eq.s32.totalorder %s36, 0
      %p231 = por %p229, %p230
      %s232 = ssub.s32 %s30, %s37
      %p233 = scmp.eq.s32.totalorder %s232, 0
      %s235 = sadd.s32 %s234, 1
      %s236 = scalar_select %p233, %s234, %s235
      %p239 = pneg %p233
      %p240 = scmp.eq.s32.totalorder %s30, 1
      %p241 = por %p239, %p240
      %p242 = scmp.ne.s32.totalorder %s234, %s237
      %p243 = scmp.eq.s32.totalorder %s30, 0
      %p244 = por %p242, %p243
      %p245 = scmp.ne.s32.totalorder %s234, %s237
      %p246 = scmp.eq.s32.totalorder %s35, 1
      %p247 = por %p245, %p246
      %p248 = scmp.ne.s32.totalorder %s237, %s238
      %p249 = scmp.eq.s32.totalorder %s35, 0
      %p250 = por %p248, %p249
      %p251 = scmp.ne.s32.totalorder %s237, %s238
      %p252 = scmp.eq.s32.totalorder %s36, 1
      %p253 = por %p251, %p252
      %p255 = scmp.ne.s32.totalorder %s238, %s254
      %p256 = scmp.eq.s32.totalorder %s36, 0
      %p257 = por %p255, %p256
      %s258 = ssub.s32 %s30, %s37
      %p259 = scmp.eq.s32.totalorder %s258, 0
      %s261 = sadd.s32 %s260, 1
      %s262 = scalar_select %p259, %s260, %s261
      %p265 = pneg %p259
      %p266 = scmp.eq.s32.totalorder %s30, 1
      %p267 = por %p265, %p266
      %p268 = scmp.ne.s32.totalorder %s260, %s263
      %p269 = scmp.eq.s32.totalorder %s30, 0
      %p270 = por %p268, %p269
      %p271 = scmp.ne.s32.totalorder %s260, %s263
      %p272 = scmp.eq.s32.totalorder %s35, 1
      %p273 = por %p271, %p272
      %p274 = scmp.ne.s32.totalorder %s263, %s264
      %p275 = scmp.eq.s32.totalorder %s35, 0
      %p276 = por %p274, %p275
      %p277 = scmp.ne.s32.totalorder %s263, %s264
      %p278 = scmp.eq.s32.totalorder %s36, 1
      %p279 = por %p277, %p278
      %p281 = scmp.ne.s32.totalorder %s264, %s280
      %p282 = scmp.eq.s32.totalorder %s36, 0
      %p283 = por %p281, %p282
      %p284 = scmp.le.s32.totalorder 1, %s30
      %p285 = scmp.lt.s32.totalorder %s30, 3
      %p286 = pnand %p284, %p285
      %p287 = pneg %p286
      // Predicated region
      $region9: #{tpu_custom_call.1} parent=5 // pred_check
        _
      $region10: #{tpu_custom_call.1} parent=5 // pred_check_branch
        %289 = sbr.rel (%p286) target = $region12
      $region11: #{tpu_custom_call.1} parent=5 // pred_region
        %s290 = ssub.s32 %s30, 1
        // Predicated region
        $region13: #{tpu_custom_call.1} parent=11 // pred_check
          %p291 = pneg %p51
        $region14: #{tpu_custom_call.1} parent=11 // pred_check_branch
          %293 = sbr.rel (%p291) target = $region16
        $region15: #{tpu_custom_call.1} parent=11 // pred_region
          _
        $region16: #{tpu_custom_call.1} parent=11 // pred_fallthru
          _
        // Predicated region
        $region17: #{tpu_custom_call.1} parent=11 // pred_check
          %p294 = pneg %p72
        $region18: #{tpu_custom_call.1} parent=11 // pred_check_branch
          %296 = sbr.rel (%p294) target = $region20
        $region19: #{tpu_custom_call.1} parent=11 // pred_region
          _
        $region20: #{tpu_custom_call.1} parent=11 // pred_fallthru
          _
        // Predicated region
        $region21: #{tpu_custom_call.1} parent=11 // pred_check
          %p297 = pneg %p93
        $region22: #{tpu_custom_call.1} parent=11 // pred_check_branch
          %299 = sbr.rel (%p297) target = $region24
        $region23: #{tpu_custom_call.1} parent=11 // pred_region
          _
        $region24: #{tpu_custom_call.1} parent=11 // pred_fallthru
          _
        // Predicated region
        $region25: #{tpu_custom_call.1} parent=11 // pred_check
          %p300 = pneg %p114
        $region26: #{tpu_custom_call.1} parent=11 // pred_check_branch
          %302 = sbr.rel (%p300) target = $region28
        $region27: #{tpu_custom_call.1} parent=11 // pred_region
          _
        $region28: #{tpu_custom_call.1} parent=11 // pred_fallthru
          _
        // Predicated region
        $region29: #{tpu_custom_call.1} parent=11 // pred_check
          %p303 = pneg %p135
        $region30: #{tpu_custom_call.1} parent=11 // pred_check_branch
          %305 = sbr.rel (%p303) target = $region32
        $region31: #{tpu_custom_call.1} parent=11 // pred_region
          _
        $region32: #{tpu_custom_call.1} parent=11 // pred_fallthru
          _
        // Predicated region
        $region33: #{tpu_custom_call.1} parent=11 // pred_check
          %p306 = pneg %p156
        $region34: #{tpu_custom_call.1} parent=11 // pred_check_branch
          %308 = sbr.rel (%p306) target = $region36
        $region35: #{tpu_custom_call.1} parent=11 // pred_region
          _
        $region36: #{tpu_custom_call.1} parent=11 // pred_fallthru
          _
        // Predicated region
        $region37: #{tpu_custom_call.1} parent=11 // pred_check
          %p309 = pneg %p177
        $region38: #{tpu_custom_call.1} parent=11 // pred_check_branch
          %311 = sbr.rel (%p309) target = $region40
        $region39: #{tpu_custom_call.1} parent=11 // pred_region
          _
        $region40: #{tpu_custom_call.1} parent=11 // pred_fallthru
          _
        // Predicated region
        $region41: #{tpu_custom_call.1} parent=11 // pred_check
          %p312 = pneg %p198
        $region42: #{tpu_custom_call.1} parent=11 // pred_check_branch
          %314 = sbr.rel (%p312) target = $region44
        $region43: #{tpu_custom_call.1} parent=11 // pred_region
          _
        $region44: #{tpu_custom_call.1} parent=11 // pred_fallthru
          _
      $region12: #{tpu_custom_call.1} parent=5 // pred_fallthru
        _
      %p315 = scmp.lt.s32.totalorder %s30, 2
      // Predicated region
      $region45: #{tpu_custom_call.1} parent=5 // pred_check
        %p316 = pneg %p315
      $region46: #{tpu_custom_call.1} parent=5 // pred_check_branch
        %318 = sbr.rel (%p316) target = $region48
      $region47: #{tpu_custom_call.1} parent=5 // pred_region
        _
      $region48: #{tpu_custom_call.1} parent=5 // pred_fallthru
        _
      %p319 = scmp.le.s32.totalorder 1, %s30
      %p320 = scmp.lt.s32.totalorder %s30, 3
      %p321 = pnand %p319, %p320
      %p322 = pneg %p321
      // Predicated region
      $region49: #{tpu_custom_call.1} parent=5 // pred_check
        _
      $region50: #{tpu_custom_call.1} parent=5 // pred_check_branch
        %324 = sbr.rel (%p321) target = $region52
      $region51: #{tpu_custom_call.1} parent=5 // pred_region
        %s325 = ssub.s32 %s30, 1
        %p326 = pneg %p51
        %p327 = pneg %p48
        %p328 = pneg %p72
        %p329 = pneg %p69
        %p330 = pneg %p93
        %p331 = pneg %p90
        %p332 = pneg %p114
        %p333 = pneg %p111
        %p334 = pneg %p135
        %p335 = pneg %p132
        %p336 = pneg %p156
        %p337 = pneg %p153
        %p338 = pneg %p177
        %p339 = pneg %p174
        %p340 = pneg %p198
        %p341 = pneg %p195
        %p342 = pneg %p224
        %p343 = pneg %p221
        %s344 = sand.u32 %s211, 1
        %s345 = scalar_lea.sflag [#allocation6], %s344
        %s346 = sand.u32 %s211, 1
        %s347 = smul.addr %s346, 32
        %s348 = scalar_lea.vmem [#allocation5], %s347
        %p349 = pneg %p250
        %p350 = pneg %p247
        %s351 = sand.u32 %s35, 1
        %s352 = scalar_lea.sflag [#allocation8], %s351
        %s353 = sand.u32 %s237, 1
        %s354 = smul.addr %s353, 32
        %s355 = scalar_lea.vmem [#allocation7], %s354
        %p356 = pneg %p276
        %p357 = pneg %p273
        %s358 = sand.u32 %s35, 1
        %s359 = scalar_lea.sflag [#allocation8], %s358
        %s360 = sand.u32 %s263, 1
        %s361 = smul.addr %s360, 32
        %s362 = scalar_lea.vmem [#allocation9], %s361
        %s363 = smul.u32 4, %s35
        %s364 = smul.u32 4, %s35
        %s365 = smul.u32 4, %s35
        %s367 = smul.u32 %s35, 256
        loop: start=0, step=1, limit=256
        $region53: #{tpu_custom_call.1} parent=51 // loop_pre_header
          _
        $region54: #{tpu_custom_call.1} parent=51 // loop_header
          %s369 = sphi 0, %s373
          %p370 = scmp.ge.s32.totalorder %s369, 256
        $region55: #{tpu_custom_call.1} parent=51 // loop_header_branch
          %372 = sbr.rel (%p370) target = $region59
        $region56: #{tpu_custom_call.1} parent=51 // loop_body
          %s374 = sadd.s32 %s367, %s369
          %s375 = sld [smem:[#allocation4 + %s374]]
          %p376 = scmp.gt.s32.totalorder %s375, 0
          %s377 = scalar_select %p376, %s375, 0
          %p378 = scmp.lt.s32.totalorder %s377, 20
          %s379 = scalar_select %p378, %s377, 20
          %s380 = scalar_lea.vmem %s1, %s379
          %v381 = vld [vmem:[%s380] sm:$0x1]
          %s382 = scalar_lea.vmem [#allocation2], %s369
          %vm383 = vcmask 253952
          %384 = vst.msk [vmem:[%s382] sm:$0x1] %vm383, %v381
          %s385 = sadd.s32 %s369, 255
          %p386 = scmp.lt.s32.totalorder %s385, 0
          %s387 = ssub.s32 0, %s385
          %s388 = scalar_select %p386, %s387, %s385
          %s389 = sand.u32 %s388, 255
          %s390 = ssub.s32 0, %s389
          %s391 = scalar_select %p386, %s390, %s389
          %p392 = scmp.ne.s32.totalorder %s391, 0
          %p393 = scmp.lt.s32.totalorder %s391, 0
          %p394 = pnand %p393, %p392
          %p395 = pneg %p394
          %s396 = sadd.s32 %s391, 256
          %s397 = scalar_select %p395, %s396, %s391
          %399 = vrot.lane.b32.xlu0 %v381, 32
          %v400 = vpop.permute.xlu0 %399
          %s402 = scalar_lea.vmem [#allocation2], %s397
          %vm403 = vcmask 516352
          %404 = vst.msk [vmem:[%s402] sm:$0x1] %vm403, %v400
          %s405 = sadd.s32 %s369, 254
          %p406 = scmp.lt.s32.totalorder %s405, 0
          %s407 = ssub.s32 0, %s405
          %s408 = scalar_select %p406, %s407, %s405
          %s409 = sand.u32 %s408, 255
          %s410 = ssub.s32 0, %s409
          %s411 = scalar_select %p406, %s410, %s409
          %p412 = scmp.ne.s32.totalorder %s411, 0
          %p413 = scmp.lt.s32.totalorder %s411, 0
          %p414 = pnand %p413, %p412
          %p415 = pneg %p414
          %s416 = sadd.s32 %s411, 256
          %s417 = scalar_select %p415, %s416, %s411
          %418 = vrot.lane.b32.xlu0 %v381, 64
          %v419 = vpop.permute.xlu0 %418
          %s421 = scalar_lea.vmem [#allocation2], %s417
          %vm422 = vcmask 778752
          %423 = vst.msk [vmem:[%s421] sm:$0x1] %vm422, %v419
        $region57: #{tpu_custom_call.1} parent=51 // loop_footer
          %s373 = sadd.s32 1, %s369
        $region58: #{tpu_custom_call.1} parent=51 // loop_footer_branch
          %368 = sbr.rel target = $region54
        $region59: #{tpu_custom_call.1} parent=51 // loop_exit
          _
        %v424 = vld [vmem:[#allocation2] sm:$0xff]
        %v425 = vld [vmem:[#allocation2 + $0x8] sm:$0xff]
        %v426 = vld [vmem:[#allocation2 + $0x10] sm:$0xff]
        %v427 = vld [vmem:[#allocation2 + $0x18] sm:$0xff]
        %v428 = vld [vmem:[#allocation2 + $0x20] sm:$0xff]
        %v429 = vld [vmem:[#allocation2 + $0x28] sm:$0xff]
        %v430 = vld [vmem:[#allocation2 + $0x30] sm:$0xff]
        %v431 = vld [vmem:[#allocation2 + $0x38] sm:$0xff]
        %v432 = vld [vmem:[#allocation2 + $0x40] sm:$0xff]
        %v433 = vld [vmem:[#allocation2 + $0x48] sm:$0xff]
        %v434 = vld [vmem:[#allocation2 + $0x50] sm:$0xff]
        %v435 = vld [vmem:[#allocation2 + $0x58] sm:$0xff]
        %v436 = vld [vmem:[#allocation2 + $0x60] sm:$0xff]
        %v437 = vld [vmem:[#allocation2 + $0x68] sm:$0xff]
        %v438 = vld [vmem:[#allocation2 + $0x70] sm:$0xff]
        %v439 = vld [vmem:[#allocation2 + $0x78] sm:$0xff]
        %v440 = vld [vmem:[#allocation2 + $0x80] sm:$0xff]
        %v441 = vld [vmem:[#allocation2 + $0x88] sm:$0xff]
        %v442 = vld [vmem:[#allocation2 + $0x90] sm:$0xff]
        %v443 = vld [vmem:[#allocation2 + $0x98] sm:$0xff]
        %v444 = vld [vmem:[#allocation2 + $0xa0] sm:$0xff]
        %v445 = vld [vmem:[#allocation2 + $0xa8] sm:$0xff]
        %v446 = vld [vmem:[#allocation2 + $0xb0] sm:$0xff]
        %v447 = vld [vmem:[#allocation2 + $0xb8] sm:$0xff]
        %v448 = vld [vmem:[#allocation2 + $0xc0] sm:$0xff]
        %v449 = vld [vmem:[#allocation2 + $0xc8] sm:$0xff]
        %v450 = vld [vmem:[#allocation2 + $0xd0] sm:$0xff]
        %v451 = vld [vmem:[#allocation2 + $0xd8] sm:$0xff]
        %v452 = vld [vmem:[#allocation2 + $0xe0] sm:$0xff]
        %v453 = vld [vmem:[#allocation2 + $0xe8] sm:$0xff]
        %v454 = vld [vmem:[#allocation2 + $0xf0] sm:$0xff]
        %v455 = vld [vmem:[#allocation2 + $0xf8] sm:$0xff]
        %v456 = vpack.c.bf16 %v425, %v424
        %v457 = vpack.c.bf16 %v427, %v426
        %v458 = vpack.c.bf16 %v429, %v428
        %v459 = vpack.c.bf16 %v431, %v430
        %v460 = vpack.c.bf16 %v433, %v432
        %v461 = vpack.c.bf16 %v435, %v434
        %v462 = vpack.c.bf16 %v437, %v436
        %v463 = vpack.c.bf16 %v439, %v438
        %v464 = vpack.c.bf16 %v441, %v440
        %v465 = vpack.c.bf16 %v443, %v442
        %v466 = vpack.c.bf16 %v445, %v444
        %v467 = vpack.c.bf16 %v447, %v446
        %v468 = vpack.c.bf16 %v449, %v448
        %v469 = vpack.c.bf16 %v451, %v450
        %v470 = vpack.c.bf16 %v453, %v452
        %v471 = vpack.c.bf16 %v455, %v454
        %v472 = vld [vmem:[%s2] sm:$0xf]
        %v473 = vld [vmem:[%s2 + $0x4] sm:$0xf]
        %v474 = vld [vmem:[%s2 + $0x8] sm:$0xf]
        %v475 = vld [vmem:[%s2 + $0xc] sm:$0xf]
        %v476 = vld [vmem:[%s2 + $0x10] sm:$0xf]
        %v477 = vld [vmem:[%s2 + $0x14] sm:$0xf]
        %v478 = vld [vmem:[%s2 + $0x18] sm:$0xf]
        %v479 = vld [vmem:[%s2 + $0x1c] sm:$0xf]
        %v480 = vld [vmem:[%s2 + $0x20] sm:$0xf]
        %v481 = vld [vmem:[%s2 + $0x24] sm:$0xf]
        %v482 = vld [vmem:[%s2 + $0x28] sm:$0xf]
        %v483 = vld [vmem:[%s2 + $0x2c] sm:$0xf]
        %v484 = vld [vmem:[%s3] sm:$0x1]
        %v486 = vlaneseq
        %v487 = vshrl.u32 %v486, 7
        %v488 = vsub.s32 0, %v487
        %v489 = vrot.slane %v484, %v488
        %v503 = vunpack.c.l.b16 %v472
        %v504 = vunpack.c.l.b16 %v473
        %v505 = vunpack.c.l.b16 %v474
        %v506 = vunpack.c.l.b16 %v475
        %v507 = vunpack.c.l.b16 %v476
        %v508 = vunpack.c.l.b16 %v477
        %v509 = vunpack.c.l.b16 %v478
        %v510 = vunpack.c.l.b16 %v479
        %v511 = vunpack.c.l.b16 %v480
        %v512 = vunpack.c.l.b16 %v481
        %v513 = vunpack.c.l.b16 %v482
        %v514 = vunpack.c.l.b16 %v483
        %v515 = vpack.c.b16 %v504, %v503
        %v516 = vpack.c.b16 %v506, %v505
        %v517 = vpack.c.b16 %v508, %v507
        %v518 = vpack.c.b16 %v510, %v509
        %v519 = vpack.c.b16 %v512, %v511
        %v520 = vpack.c.b16 %v514, %v513
        %vm527 = vcmask 785408
        %v529 = vsel %vm527, %v456, 0
        %v532 = vsel %vm527, %v457, 0
        %v535 = vsel %vm527, %v458, 0
        %v538 = vsel %vm527, %v459, 0
        %v541 = vsel %vm527, %v460, 0
        %v544 = vsel %vm527, %v461, 0
        %v547 = vsel %vm527, %v462, 0
        %v550 = vsel %vm527, %v463, 0
        %v553 = vsel %vm527, %v464, 0
        %v556 = vsel %vm527, %v465, 0
        %v559 = vsel %vm527, %v466, 0
        %v562 = vsel %vm527, %v467, 0
        %v565 = vsel %vm527, %v468, 0
        %v568 = vsel %vm527, %v469, 0
        %v571 = vsel %vm527, %v470, 0
        %v574 = vsel %vm527, %v471, 0
        %576 = vmatprep.subr.bf16.mxu0 0
        %577 = vmatpush1.bf16.msra.mxu0 %v515
        %578 = vmatprep.subr.bf16.mxu0 0
        %579 = vmatpush1.bf16.msra.mxu0 %v516
        %580 = vmatprep.subr.bf16.mxu0 0
        %581 = vmatpush1.bf16.msra.mxu0 %v517
        %582 = vmatprep.subr.bf16.mxu0 0
        %583 = vmatpush1.bf16.msra.mxu0 %v518
        %584 = vmatprep.subr.bf16.mxu0 0
        %585 = vmatpush1.bf16.msra.mxu0 %v519
        %586 = vmatprep.subr.bf16.mxu0 0
        %587 = vmatpush1.bf16.msra.mxu0 %v520
        %588 = vmatprep.subr.bf16.mxu0 0
        %589 = vmatpush1.bf16.msra.mxu0 0
        %590 = vmatprep.subr.bf16.mxu0 0
        %591 = vmatpush1.bf16.msra.mxu0 0
        %592 = vmatprep.subr.bf16.mxu0 0
        %593 = vmatpush1.bf16.msra.mxu0 0
        %594 = vmatprep.subr.bf16.mxu0 0
        %595 = vmatpush1.bf16.msra.mxu0 0
        %596 = vmatprep.subr.bf16.mxu0 0
        %597 = vmatpush1.bf16.msra.mxu0 0
        %598 = vmatprep.subr.bf16.mxu0 0
        %599 = vmatpush1.bf16.msra.mxu0 0
        %600 = vmatprep.subr.bf16.mxu0 0
        %601 = vmatpush1.bf16.msra.mxu0 0
        %602 = vmatprep.subr.bf16.mxu0 0
        %603 = vmatpush1.bf16.msra.mxu0 0
        %604 = vmatprep.subr.bf16.mxu0 0
        %605 = vmatpush1.bf16.msra.mxu0 0
        %606 = vmatprep.subr.bf16.mxu0 0
        %607 = vmatpush1.bf16.msra.mxu0 0
        %608 = vmatprep.mubr.bf16.mxu0 0
        %609 = vmatmul.mubr.bf16.gmra.mrb[0].mxu0 %v529
        %v610 = vpop.f32.mrb[0].mxu0
        %v611 = vadd.f32 %v489, %v610
        %v612 = vpop.f32.mrb[0].mxu0
        %v613 = vpop.f32.mrb[0].mxu0
        %v614 = vadd.f32 %v489, %v613
        %v615 = vpop.f32.mrb[0].mxu0
        %616 = vmatprep.mubr.bf16.mxu0 0
        %617 = vmatmul.mubr.bf16.gmra.mrb[0].mxu0 %v532
        %v618 = vpop.f32.mrb[0].mxu0
        %v619 = vadd.f32 %v489, %v618
        %v620 = vpop.f32.mrb[0].mxu0
        %v621 = vpop.f32.mrb[0].mxu0
        %v622 = vadd.f32 %v489, %v621
        %v623 = vpop.f32.mrb[0].mxu0
        %624 = vmatprep.mubr.bf16.mxu0 0
        %625 = vmatmul.mubr.bf16.gmra.mrb[0].mxu0 %v535
        %v626 = vpop.f32.mrb[0].mxu0
        %v627 = vadd.f32 %v489, %v626
        %v628 = vpop.f32.mrb[0].mxu0
        %v629 = vpop.f32.mrb[0].mxu0
        %v630 = vadd.f32 %v489, %v629
        %v631 = vpop.f32.mrb[0].mxu0
        %632 = vmatprep.mubr.bf16.mxu0 0
        %633 = vmatmul.mubr.bf16.gmra.mrb[0].mxu0 %v538
        %v634 = vpop.f32.mrb[0].mxu0
        %v635 = vadd.f32 %v489, %v634
        %v636 = vpop.f32.mrb[0].mxu0
        %v637 = vpop.f32.mrb[0].mxu0
        %v638 = vadd.f32 %v489, %v637
        %v639 = vpop.f32.mrb[0].mxu0
        %640 = vmatprep.mubr.bf16.mxu0 0
        %641 = vmatmul.mubr.bf16.gmra.mrb[0].mxu0 %v541
        %v642 = vpop.f32.mrb[0].mxu0
        %v643 = vadd.f32 %v489, %v642
        %v644 = vpop.f32.mrb[0].mxu0
        %v645 = vpop.f32.mrb[0].mxu0
        %v646 = vadd.f32 %v489, %v645
        %v647 = vpop.f32.mrb[0].mxu0
        %648 = vmatprep.mubr.bf16.mxu0 0
        %649 = vmatmul.mubr.bf16.gmra.mrb[0].mxu0 %v544
        %v650 = vpop.f32.mrb[0].mxu0
        %v651 = vadd.f32 %v489, %v650
        %v652 = vpop.f32.mrb[0].mxu0
        %v653 = vpop.f32.mrb[0].mxu0
        %v654 = vadd.f32 %v489, %v653
        %v655 = vpop.f32.mrb[0].mxu0
        %656 = vmatprep.mubr.bf16.mxu0 0
        %657 = vmatmul.mubr.bf16.gmra.mrb[0].mxu0 %v547
        %v658 = vpop.f32.mrb[0].mxu0
        %v659 = vadd.f32 %v489, %v658
        %v660 = vpop.f32.mrb[0].mxu0
        %v661 = vpop.f32.mrb[0].mxu0
        %v662 = vadd.f32 %v489, %v661
        %v663 = vpop.f32.mrb[0].mxu0
        %664 = vmatprep.mubr.bf16.mxu0 0
        %665 = vmatmul.mubr.bf16.gmra.mrb[0].mxu0 %v550
        %v666 = vpop.f32.mrb[0].mxu0
        %v667 = vadd.f32 %v489, %v666
        %v668 = vpop.f32.mrb[0].mxu0
        %v669 = vpop.f32.mrb[0].mxu0
        %v670 = vadd.f32 %v489, %v669
        %v671 = vpop.f32.mrb[0].mxu0
        %672 = vmatprep.mubr.bf16.mxu0 0
        %673 = vmatmul.mubr.bf16.gmra.mrb[0].mxu0 %v553
        %v674 = vpop.f32.mrb[0].mxu0
        %v675 = vadd.f32 %v489, %v674
        %v676 = vpop.f32.mrb[0].mxu0
        %v677 = vpop.f32.mrb[0].mxu0
        %v678 = vadd.f32 %v489, %v677
        %v679 = vpop.f32.mrb[0].mxu0
        %680 = vmatprep.mubr.bf16.mxu0 0
        %681 = vmatmul.mubr.bf16.gmra.mrb[0].mxu0 %v556
        %v682 = vpop.f32.mrb[0].mxu0
        %v683 = vadd.f32 %v489, %v682
        %v684 = vpop.f32.mrb[0].mxu0
        %v685 = vpop.f32.mrb[0].mxu0
        %v686 = vadd.f32 %v489, %v685
        %v687 = vpop.f32.mrb[0].mxu0
        %688 = vmatprep.mubr.bf16.mxu0 0
        %689 = vmatmul.mubr.bf16.gmra.mrb[0].mxu0 %v559
        %v690 = vpop.f32.mrb[0].mxu0
        %v691 = vadd.f32 %v489, %v690
        %v692 = vpop.f32.mrb[0].mxu0
        %v693 = vpop.f32.mrb[0].mxu0
        %v694 = vadd.f32 %v489, %v693
        %v695 = vpop.f32.mrb[0].mxu0
        %696 = vmatprep.mubr.bf16.mxu0 0
        %697 = vmatmul.mubr.bf16.gmra.mrb[0].mxu0 %v562
        %v698 = vpop.f32.mrb[0].mxu0
        %v699 = vadd.f32 %v489, %v698
        %v700 = vpop.f32.mrb[0].mxu0
        %v701 = vpop.f32.mrb[0].mxu0
        %v702 = vadd.f32 %v489, %v701
        %v703 = vpop.f32.mrb[0].mxu0
        %704 = vmatprep.mubr.bf16.mxu0 0
        %705 = vmatmul.mubr.bf16.gmra.mrb[0].mxu0 %v565
        %v706 = vpop.f32.mrb[0].mxu0
        %v707 = vadd.f32 %v489, %v706
        %v708 = vpop.f32.mrb[0].mxu0
        %v709 = vpop.f32.mrb[0].mxu0
        %v710 = vadd.f32 %v489, %v709
        %v711 = vpop.f32.mrb[0].mxu0
        %712 = vmatprep.mubr.bf16.mxu0 0
        %713 = vmatmul.mubr.bf16.gmra.mrb[0].mxu0 %v568
        %v714 = vpop.f32.mrb[0].mxu0
        %v715 = vadd.f32 %v489, %v714
        %v716 = vpop.f32.mrb[0].mxu0
        %v717 = vpop.f32.mrb[0].mxu0
        %v718 = vadd.f32 %v489, %v717
        %v719 = vpop.f32.mrb[0].mxu0
        %720 = vmatprep.mubr.bf16.mxu0 0
        %721 = vmatmul.mubr.bf16.gmra.mrb[0].mxu0 %v571
        %v722 = vpop.f32.mrb[0].mxu0
        %v723 = vadd.f32 %v489, %v722
        %v724 = vpop.f32.mrb[0].mxu0
        %v725 = vpop.f32.mrb[0].mxu0
        %v726 = vadd.f32 %v489, %v725
        %v727 = vpop.f32.mrb[0].mxu0
        %728 = vmatprep.mubr.bf16.mxu0 0
        %729 = vmatmul.mubr.bf16.gmra.mrb[0].mxu0 %v574
        %v730 = vpop.f32.mrb[0].mxu0
        %v731 = vadd.f32 %v489, %v730
        %v732 = vpop.f32.mrb[0].mxu0
        %v733 = vpop.f32.mrb[0].mxu0
        %v734 = vadd.f32 %v489, %v733
        %v735 = vpop.f32.mrb[0].mxu0
        %736 = vdwg.mxu0
        %v737 = vlaneseq
        %v738 = vshrl.u32 %v737, 7
        %v739 = vld [vmem:[%s4] sm:$0x1]
        %v740 = vlaneseq
        %v741 = vshrl.u32 %v740, 7
        %v742 = vsub.s32 0, %v741
        %v743 = vrot.slane %v739, %v742
        %vm744 = vcmp.lt.s32.totalorder %v738, %v743
        %v745 = vsel %vm744, %v611, -1e+30
        %v746 = vsel %vm744, %v614, -1e+30
        %v747 = vsel %vm744, %v619, -1e+30
        %v748 = vsel %vm744, %v622, -1e+30
        %v749 = vsel %vm744, %v627, -1e+30
        %v750 = vsel %vm744, %v630, -1e+30
        %v751 = vsel %vm744, %v635, -1e+30
        %v752 = vsel %vm744, %v638, -1e+30
        %v753 = vsel %vm744, %v643, -1e+30
        %v754 = vsel %vm744, %v646, -1e+30
        %v755 = vsel %vm744, %v651, -1e+30
        %v756 = vsel %vm744, %v654, -1e+30
        %v757 = vsel %vm744, %v659, -1e+30
        %v758 = vsel %vm744, %v662, -1e+30
        %v759 = vsel %vm744, %v667, -1e+30
        %v760 = vsel %vm744, %v670, -1e+30
        %v761 = vsel %vm744, %v675, -1e+30
        %v762 = vsel %vm744, %v678, -1e+30
        %v763 = vsel %vm744, %v683, -1e+30
        %v764 = vsel %vm744, %v686, -1e+30
        %v765 = vsel %vm744, %v691, -1e+30
        %v766 = vsel %vm744, %v694, -1e+30
        %v767 = vsel %vm744, %v699, -1e+30
        %v768 = vsel %vm744, %v702, -1e+30
        %v769 = vsel %vm744, %v707, -1e+30
        %v770 = vsel %vm744, %v710, -1e+30
        %v771 = vsel %vm744, %v715, -1e+30
        %v772 = vsel %vm744, %v718, -1e+30
        %v773 = vsel %vm744, %v723, -1e+30
        %v774 = vsel %vm744, %v726, -1e+30
        %v775 = vsel %vm744, %v731, -1e+30
        %v776 = vsel %vm744, %v734, -1e+30
        %vm777 = vcmask 261120
        %v778 = vsel %vm777, %v745, -inf
        %v779 = vrot.slane %v778, 4
        %v780 = vmax.f32 %v778, %v779
        %v781 = vrot.slane %v780, 2
        %v782 = vmax.f32 %v780, %v781
        %v783 = vrot.slane %v782, 1
        %v784 = vmax.f32 %v782, %v783
        %v785 = vsel %vm777, %v746, -inf
        %v786 = vrot.slane %v785, 4
        %v787 = vmax.f32 %v785, %v786
        %v788 = vrot.slane %v787, 2
        %v789 = vmax.f32 %v787, %v788
        %v790 = vrot.slane %v789, 1
        %v791 = vmax.f32 %v789, %v790
        %v792 = vsel %vm777, %v747, -inf
        %v793 = vrot.slane %v792, 4
        %v794 = vmax.f32 %v792, %v793
        %v795 = vrot.slane %v794, 2
        %v796 = vmax.f32 %v794, %v795
        %v797 = vrot.slane %v796, 1
        %v798 = vmax.f32 %v796, %v797
        %v799 = vsel %vm777, %v748, -inf
        %v800 = vrot.slane %v799, 4
        %v801 = vmax.f32 %v799, %v800
        %v802 = vrot.slane %v801, 2
        %v803 = vmax.f32 %v801, %v802
        %v804 = vrot.slane %v803, 1
        %v805 = vmax.f32 %v803, %v804
        %v806 = vsel %vm777, %v749, -inf
        %v807 = vrot.slane %v806, 4
        %v808 = vmax.f32 %v806, %v807
        %v809 = vrot.slane %v808, 2
        %v810 = vmax.f32 %v808, %v809
        %v811 = vrot.slane %v810, 1
        %v812 = vmax.f32 %v810, %v811
        %v813 = vsel %vm777, %v750, -inf
        %v814 = vrot.slane %v813, 4
        %v815 = vmax.f32 %v813, %v814
        %v816 = vrot.slane %v815, 2
        %v817 = vmax.f32 %v815, %v816
        %v818 = vrot.slane %v817, 1
        %v819 = vmax.f32 %v817, %v818
        %v820 = vsel %vm777, %v751, -inf
        %v821 = vrot.slane %v820, 4
        %v822 = vmax.f32 %v820, %v821
        %v823 = vrot.slane %v822, 2
        %v824 = vmax.f32 %v822, %v823
        %v825 = vrot.slane %v824, 1
        %v826 = vmax.f32 %v824, %v825
        %v827 = vsel %vm777, %v752, -inf
        %v828 = vrot.slane %v827, 4
        %v829 = vmax.f32 %v827, %v828
        %v830 = vrot.slane %v829, 2
        %v831 = vmax.f32 %v829, %v830
        %v832 = vrot.slane %v831, 1
        %v833 = vmax.f32 %v831, %v832
        %v834 = vsel %vm777, %v753, -inf
        %v835 = vrot.slane %v834, 4
        %v836 = vmax.f32 %v834, %v835
        %v837 = vrot.slane %v836, 2
        %v838 = vmax.f32 %v836, %v837
        %v839 = vrot.slane %v838, 1
        %v840 = vmax.f32 %v838, %v839
        %v841 = vsel %vm777, %v754, -inf
        %v842 = vrot.slane %v841, 4
        %v843 = vmax.f32 %v841, %v842
        %v844 = vrot.slane %v843, 2
        %v845 = vmax.f32 %v843, %v844
        %v846 = vrot.slane %v845, 1
        %v847 = vmax.f32 %v845, %v846
        %v848 = vsel %vm777, %v755, -inf
        %v849 = vrot.slane %v848, 4
        %v850 = vmax.f32 %v848, %v849
        %v851 = vrot.slane %v850, 2
        %v852 = vmax.f32 %v850, %v851
        %v853 = vrot.slane %v852, 1
        %v854 = vmax.f32 %v852, %v853
        %v855 = vsel %vm777, %v756, -inf
        %v856 = vrot.slane %v855, 4
        %v857 = vmax.f32 %v855, %v856
        %v858 = vrot.slane %v857, 2
        %v859 = vmax.f32 %v857, %v858
        %v860 = vrot.slane %v859, 1
        %v861 = vmax.f32 %v859, %v860
        %v862 = vsel %vm777, %v757, -inf
        %v863 = vrot.slane %v862, 4
        %v864 = vmax.f32 %v862, %v863
        %v865 = vrot.slane %v864, 2
        %v866 = vmax.f32 %v864, %v865
        %v867 = vrot.slane %v866, 1
        %v868 = vmax.f32 %v866, %v867
        %v869 = vsel %vm777, %v758, -inf
        %v870 = vrot.slane %v869, 4
        %v871 = vmax.f32 %v869, %v870
        %v872 = vrot.slane %v871, 2
        %v873 = vmax.f32 %v871, %v872
        %v874 = vrot.slane %v873, 1
        %v875 = vmax.f32 %v873, %v874
        %v876 = vsel %vm777, %v759, -inf
        %v877 = vrot.slane %v876, 4
        %v878 = vmax.f32 %v876, %v877
        %v879 = vrot.slane %v878, 2
        %v880 = vmax.f32 %v878, %v879
        %v881 = vrot.slane %v880, 1
        %v882 = vmax.f32 %v880, %v881
        %v883 = vsel %vm777, %v760, -inf
        %v884 = vrot.slane %v883, 4
        %v885 = vmax.f32 %v883, %v884
        %v886 = vrot.slane %v885, 2
        %v887 = vmax.f32 %v885, %v886
        %v888 = vrot.slane %v887, 1
        %v889 = vmax.f32 %v887, %v888
        %v890 = vsel %vm777, %v761, -inf
        %v891 = vrot.slane %v890, 4
        %v892 = vmax.f32 %v890, %v891
        %v893 = vrot.slane %v892, 2
        %v894 = vmax.f32 %v892, %v893
        %v895 = vrot.slane %v894, 1
        %v896 = vmax.f32 %v894, %v895
        %v897 = vsel %vm777, %v762, -inf
        %v898 = vrot.slane %v897, 4
        %v899 = vmax.f32 %v897, %v898
        %v900 = vrot.slane %v899, 2
        %v901 = vmax.f32 %v899, %v900
        %v902 = vrot.slane %v901, 1
        %v903 = vmax.f32 %v901, %v902
        %v904 = vsel %vm777, %v763, -inf
        %v905 = vrot.slane %v904, 4
        %v906 = vmax.f32 %v904, %v905
        %v907 = vrot.slane %v906, 2
        %v908 = vmax.f32 %v906, %v907
        %v909 = vrot.slane %v908, 1
        %v910 = vmax.f32 %v908, %v909
        %v911 = vsel %vm777, %v764, -inf
        %v912 = vrot.slane %v911, 4
        %v913 = vmax.f32 %v911, %v912
        %v914 = vrot.slane %v913, 2
        %v915 = vmax.f32 %v913, %v914
        %v916 = vrot.slane %v915, 1
        %v917 = vmax.f32 %v915, %v916
        %v918 = vsel %vm777, %v765, -inf
        %v919 = vrot.slane %v918, 4
        %v920 = vmax.f32 %v918, %v919
        %v921 = vrot.slane %v920, 2
        %v922 = vmax.f32 %v920, %v921
        %v923 = vrot.slane %v922, 1
        %v924 = vmax.f32 %v922, %v923
        %v925 = vsel %vm777, %v766, -inf
        %v926 = vrot.slane %v925, 4
        %v927 = vmax.f32 %v925, %v926
        %v928 = vrot.slane %v927, 2
        %v929 = vmax.f32 %v927, %v928
        %v930 = vrot.slane %v929, 1
        %v931 = vmax.f32 %v929, %v930
        %v932 = vsel %vm777, %v767, -inf
        %v933 = vrot.slane %v932, 4
        %v934 = vmax.f32 %v932, %v933
        %v935 = vrot.slane %v934, 2
        %v936 = vmax.f32 %v934, %v935
        %v937 = vrot.slane %v936, 1
        %v938 = vmax.f32 %v936, %v937
        %v939 = vsel %vm777, %v768, -inf
        %v940 = vrot.slane %v939, 4
        %v941 = vmax.f32 %v939, %v940
        %v942 = vrot.slane %v941, 2
        %v943 = vmax.f32 %v941, %v942
        %v944 = vrot.slane %v943, 1
        %v945 = vmax.f32 %v943, %v944
        %v946 = vsel %vm777, %v769, -inf
        %v947 = vrot.slane %v946, 4
        %v948 = vmax.f32 %v946, %v947
        %v949 = vrot.slane %v948, 2
        %v950 = vmax.f32 %v948, %v949
        %v951 = vrot.slane %v950, 1
        %v952 = vmax.f32 %v950, %v951
        %v953 = vsel %vm777, %v770, -inf
        %v954 = vrot.slane %v953, 4
        %v955 = vmax.f32 %v953, %v954
        %v956 = vrot.slane %v955, 2
        %v957 = vmax.f32 %v955, %v956
        %v958 = vrot.slane %v957, 1
        %v959 = vmax.f32 %v957, %v958
        %v960 = vsel %vm777, %v771, -inf
        %v961 = vrot.slane %v960, 4
        %v962 = vmax.f32 %v960, %v961
        %v963 = vrot.slane %v962, 2
        %v964 = vmax.f32 %v962, %v963
        %v965 = vrot.slane %v964, 1
        %v966 = vmax.f32 %v964, %v965
        %v967 = vsel %vm777, %v772, -inf
        %v968 = vrot.slane %v967, 4
        %v969 = vmax.f32 %v967, %v968
        %v970 = vrot.slane %v969, 2
        %v971 = vmax.f32 %v969, %v970
        %v972 = vrot.slane %v971, 1
        %v973 = vmax.f32 %v971, %v972
        %v974 = vsel %vm777, %v773, -inf
        %v975 = vrot.slane %v974, 4
        %v976 = vmax.f32 %v974, %v975
        %v977 = vrot.slane %v976, 2
        %v978 = vmax.f32 %v976, %v977
        %v979 = vrot.slane %v978, 1
        %v980 = vmax.f32 %v978, %v979
        %v981 = vsel %vm777, %v774, -inf
        %v982 = vrot.slane %v981, 4
        %v983 = vmax.f32 %v981, %v982
        %v984 = vrot.slane %v983, 2
        %v985 = vmax.f32 %v983, %v984
        %v986 = vrot.slane %v985, 1
        %v987 = vmax.f32 %v985, %v986
        %v988 = vsel %vm777, %v775, -inf
        %v989 = vrot.slane %v988, 4
        %v990 = vmax.f32 %v988, %v989
        %v991 = vrot.slane %v990, 2
        %v992 = vmax.f32 %v990, %v991
        %v993 = vrot.slane %v992, 1
        %v994 = vmax.f32 %v992, %v993
        %v995 = vsel %vm777, %v776, -inf
        %v996 = vrot.slane %v995, 4
        %v997 = vmax.f32 %v995, %v996
        %v998 = vrot.slane %v997, 2
        %v999 = vmax.f32 %v997, %v998
        %v1000 = vrot.slane %v999, 1
        %v1001 = vmax.f32 %v999, %v1000
        %v1002 = vmax.f32 %v784, 0.0
        %v1003 = vmax.f32 %v791, 0.0
        %v1004 = vmax.f32 %v798, 0.0
        %v1005 = vmax.f32 %v805, 0.0
        %v1006 = vmax.f32 %v812, 0.0
        %v1007 = vmax.f32 %v819, 0.0
        %v1008 = vmax.f32 %v826, 0.0
        %v1009 = vmax.f32 %v833, 0.0
        %v1010 = vmax.f32 %v840, 0.0
        %v1011 = vmax.f32 %v847, 0.0
        %v1012 = vmax.f32 %v854, 0.0
        %v1013 = vmax.f32 %v861, 0.0
        %v1014 = vmax.f32 %v868, 0.0
        %v1015 = vmax.f32 %v875, 0.0
        %v1016 = vmax.f32 %v882, 0.0
        %v1017 = vmax.f32 %v889, 0.0
        %v1018 = vmax.f32 %v896, 0.0
        %v1019 = vmax.f32 %v903, 0.0
        %v1020 = vmax.f32 %v910, 0.0
        %v1021 = vmax.f32 %v917, 0.0
        %v1022 = vmax.f32 %v924, 0.0
        %v1023 = vmax.f32 %v931, 0.0
        %v1024 = vmax.f32 %v938, 0.0
        %v1025 = vmax.f32 %v945, 0.0
        %v1026 = vmax.f32 %v952, 0.0
        %v1027 = vmax.f32 %v959, 0.0
        %v1028 = vmax.f32 %v966, 0.0
        %v1029 = vmax.f32 %v973, 0.0
        %v1030 = vmax.f32 %v980, 0.0
        %v1031 = vmax.f32 %v987, 0.0
        %v1032 = vmax.f32 %v994, 0.0
        %v1033 = vmax.f32 %v1001, 0.0
        %v1034 = vpack.c.bf16 %v1002, %v1002
        %v1035 = vpack.c.bf16 %v1003, %v1003
        %v1036 = vpack.c.bf16 %v1004, %v1004
        %v1037 = vpack.c.bf16 %v1005, %v1005
        %v1038 = vpack.c.bf16 %v1006, %v1006
        %v1039 = vpack.c.bf16 %v1007, %v1007
        %v1040 = vpack.c.bf16 %v1008, %v1008
        %v1041 = vpack.c.bf16 %v1009, %v1009
        %v1042 = vpack.c.bf16 %v1010, %v1010
        %v1043 = vpack.c.bf16 %v1011, %v1011
        %v1044 = vpack.c.bf16 %v1012, %v1012
        %v1045 = vpack.c.bf16 %v1013, %v1013
        %v1046 = vpack.c.bf16 %v1014, %v1014
        %v1047 = vpack.c.bf16 %v1015, %v1015
        %v1048 = vpack.c.bf16 %v1016, %v1016
        %v1049 = vpack.c.bf16 %v1017, %v1017
        %v1050 = vpack.c.bf16 %v1018, %v1018
        %v1051 = vpack.c.bf16 %v1019, %v1019
        %v1052 = vpack.c.bf16 %v1020, %v1020
        %v1053 = vpack.c.bf16 %v1021, %v1021
        %v1054 = vpack.c.bf16 %v1022, %v1022
        %v1055 = vpack.c.bf16 %v1023, %v1023
        %v1056 = vpack.c.bf16 %v1024, %v1024
        %v1057 = vpack.c.bf16 %v1025, %v1025
        %v1058 = vpack.c.bf16 %v1026, %v1026
        %v1059 = vpack.c.bf16 %v1027, %v1027
        %v1060 = vpack.c.bf16 %v1028, %v1028
        %v1061 = vpack.c.bf16 %v1029, %v1029
        %v1062 = vpack.c.bf16 %v1030, %v1030
        %v1063 = vpack.c.bf16 %v1031, %v1031
        %v1064 = vpack.c.bf16 %v1032, %v1032
        %v1065 = vpack.c.bf16 %v1033, %v1033
        %v1066 = vld [vmem:[%s5] sm:$0xf]
        %v1067 = vld [vmem:[%s5 + $0x4] sm:$0xf]
        %v1068 = vld [vmem:[%s5 + $0x8] sm:$0xf]
        %v1069 = vld [vmem:[%s5 + $0xc] sm:$0xf]
        %v1070 = vld [vmem:[%s6] sm:$0x1]
        %v1072 = vlaneseq
        %v1073 = vshrl.u32 %v1072, 7
        %v1074 = vsub.s32 0, %v1073
        %v1075 = vrot.slane %v1070, %v1074
        %v1109 = vunpack.c.l.b16 %v1034
        %v1110 = vunpack.c.l.b16 %v1035
        %v1111 = vunpack.c.l.b16 %v1036
        %v1112 = vunpack.c.l.b16 %v1037
        %v1113 = vunpack.c.l.b16 %v1038
        %v1114 = vunpack.c.l.b16 %v1039
        %v1115 = vunpack.c.l.b16 %v1040
        %v1116 = vunpack.c.l.b16 %v1041
        %v1117 = vunpack.c.l.b16 %v1042
        %v1118 = vunpack.c.l.b16 %v1043
        %v1119 = vunpack.c.l.b16 %v1044
        %v1120 = vunpack.c.l.b16 %v1045
        %v1121 = vunpack.c.l.b16 %v1046
        %v1122 = vunpack.c.l.b16 %v1047
        %v1123 = vunpack.c.l.b16 %v1048
        %v1124 = vunpack.c.l.b16 %v1049
        %v1125 = vunpack.c.l.b16 %v1050
        %v1126 = vunpack.c.l.b16 %v1051
        %v1127 = vunpack.c.l.b16 %v1052
        %v1128 = vunpack.c.l.b16 %v1053
        %v1129 = vunpack.c.l.b16 %v1054
        %v1130 = vunpack.c.l.b16 %v1055
        %v1131 = vunpack.c.l.b16 %v1056
        %v1132 = vunpack.c.l.b16 %v1057
        %v1133 = vunpack.c.l.b16 %v1058
        %v1134 = vunpack.c.l.b16 %v1059
        %v1135 = vunpack.c.l.b16 %v1060
        %v1136 = vunpack.c.l.b16 %v1061
        %v1137 = vunpack.c.l.b16 %v1062
        %v1138 = vunpack.c.l.b16 %v1063
        %v1139 = vunpack.c.l.b16 %v1064
        %v1140 = vunpack.c.l.b16 %v1065
        %vm1141 = vcmask 1041409
        %v1142 = vsel %vm1141, %v1110, %v1109
        %vm1143 = vcmask 1042434
        %v1144 = vsel %vm1143, %v1111, %v1142
        %vm1145 = vcmask 1043459
        %v1146 = vsel %vm1145, %v1112, %v1144
        %vm1147 = vcmask 1044484
        %v1148 = vsel %vm1147, %v1113, %v1146
        %vm1149 = vcmask 1045509
        %v1150 = vsel %vm1149, %v1114, %v1148
        %vm1151 = vcmask 1046534
        %v1152 = vsel %vm1151, %v1115, %v1150
        %vm1153 = vcmask 1047559
        %v1154 = vsel %vm1153, %v1116, %v1152
        %v1155 = vsel %vm1141, %v1118, %v1117
        %v1156 = vsel %vm1143, %v1119, %v1155
        %v1157 = vsel %vm1145, %v1120, %v1156
        %v1158 = vsel %vm1147, %v1121, %v1157
        %v1159 = vsel %vm1149, %v1122, %v1158
        %v1160 = vsel %vm1151, %v1123, %v1159
        %v1161 = vsel %vm1153, %v1124, %v1160
        %v1162 = vsel %vm1141, %v1126, %v1125
        %v1163 = vsel %vm1143, %v1127, %v1162
        %v1164 = vsel %vm1145, %v1128, %v1163
        %v1165 = vsel %vm1147, %v1129, %v1164
        %v1166 = vsel %vm1149, %v1130, %v1165
        %v1167 = vsel %vm1151, %v1131, %v1166
        %v1168 = vsel %vm1153, %v1132, %v1167
        %v1169 = vsel %vm1141, %v1134, %v1133
        %v1170 = vsel %vm1143, %v1135, %v1169
        %v1171 = vsel %vm1145, %v1136, %v1170
        %v1172 = vsel %vm1147, %v1137, %v1171
        %v1173 = vsel %vm1149, %v1138, %v1172
        %v1174 = vsel %vm1151, %v1139, %v1173
        %v1175 = vsel %vm1153, %v1140, %v1174
        %v1176 = vpack.c.b16 %v1161, %v1154
        %v1177 = vpack.c.b16 %v1175, %v1168
        %v1182 = vunpack.c.l.b16 %v1066
        %v1183 = vunpack.c.l.b16 %v1067
        %v1184 = vunpack.c.l.b16 %v1068
        %v1185 = vunpack.c.l.b16 %v1069
        %v1186 = vpack.c.b16 %v1183, %v1182
        %v1187 = vpack.c.b16 %v1185, %v1184
        %v1191 = vsel %vm777, %v1176, 0
        %v1194 = vsel %vm777, %v1177, 0
        %1196 = vmatprep.subr.bf16.mxu0 0
        %1197 = vmatpush1.bf16.msra.mxu0 %v1186
        %1198 = vmatprep.subr.bf16.mxu0 0
        %1199 = vmatpush1.bf16.msra.mxu0 %v1187
        %1200 = vmatprep.subr.bf16.mxu0 0
        %1201 = vmatpush1.bf16.msra.mxu0 0
        %1202 = vmatprep.subr.bf16.mxu0 0
        %1203 = vmatpush1.bf16.msra.mxu0 0
        %1204 = vmatprep.subr.bf16.mxu0 0
        %1205 = vmatpush1.bf16.msra.mxu0 0
        %1206 = vmatprep.subr.bf16.mxu0 0
        %1207 = vmatpush1.bf16.msra.mxu0 0
        %1208 = vmatprep.subr.bf16.mxu0 0
        %1209 = vmatpush1.bf16.msra.mxu0 0
        %1210 = vmatprep.subr.bf16.mxu0 0
        %1211 = vmatpush1.bf16.msra.mxu0 0
        %1212 = vmatprep.subr.bf16.mxu0 0
        %1213 = vmatpush1.bf16.msra.mxu0 0
        %1214 = vmatprep.subr.bf16.mxu0 0
        %1215 = vmatpush1.bf16.msra.mxu0 0
        %1216 = vmatprep.subr.bf16.mxu0 0
        %1217 = vmatpush1.bf16.msra.mxu0 0
        %1218 = vmatprep.subr.bf16.mxu0 0
        %1219 = vmatpush1.bf16.msra.mxu0 0
        %1220 = vmatprep.subr.bf16.mxu0 0
        %1221 = vmatpush1.bf16.msra.mxu0 0
        %1222 = vmatprep.subr.bf16.mxu0 0
        %1223 = vmatpush1.bf16.msra.mxu0 0
        %1224 = vmatprep.subr.bf16.mxu0 0
        %1225 = vmatpush1.bf16.msra.mxu0 0
        %1226 = vmatprep.subr.bf16.mxu0 0
        %1227 = vmatpush1.bf16.msra.mxu0 0
        %1228 = vmatprep.mubr.bf16.mxu0 0
        %1229 = vmatmul.mubr.bf16.gmra.mrb[0].mxu0 %v1191
        %v1230 = vpop.f32.mrb[0].mxu0
        %v1231 = vadd.f32 %v1075, %v1230
        %v1232 = vpop.f32.mrb[0].mxu0
        %v1233 = vpop.f32.mrb[0].mxu0
        %v1234 = vadd.f32 %v1075, %v1233
        %v1235 = vpop.f32.mrb[0].mxu0
        %1236 = vmatprep.mubr.bf16.mxu0 0
        %1237 = vmatmul.mubr.bf16.gmra.mrb[0].mxu0 %v1194
        %v1238 = vpop.f32.mrb[0].mxu0
        %v1239 = vadd.f32 %v1075, %v1238
        %v1240 = vpop.f32.mrb[0].mxu0
        %v1241 = vpop.f32.mrb[0].mxu0
        %v1242 = vadd.f32 %v1075, %v1241
        %v1243 = vpop.f32.mrb[0].mxu0
        %1244 = vdwg.mxu0
        %v1245 = vxor.u32 %v1231, 2147483648
        %v1246 = vxor.u32 %v1234, 2147483648
        %v1247 = vxor.u32 %v1239, 2147483648
        %v1248 = vxor.u32 %v1242, 2147483648
        %v1249 = vmul.f32 %v1245, 1.442695
        %v1250 = vpow.pop %v1249
        %v1251 = vmul.f32 %v1246, 1.442695
        %v1252 = vpow.pop %v1251
        %v1253 = vmul.f32 %v1247, 1.442695
        %v1254 = vpow.pop %v1253
        %v1255 = vmul.f32 %v1248, 1.442695
        %v1256 = vpow.pop %v1255
        %v1257 = vadd.f32 %v1250, 1.0
        %v1258 = vadd.f32 %v1252, 1.0
        %v1259 = vadd.f32 %v1254, 1.0
        %v1260 = vadd.f32 %v1256, 1.0
        %v1261 = vrcp.pop %v1257
        %v1262 = vmul.f32 1.0, %v1261
        %v1263 = vrcp.pop %v1258
        %v1264 = vmul.f32 1.0, %v1263
        %v1265 = vrcp.pop %v1259
        %v1266 = vmul.f32 1.0, %v1265
        %v1267 = vrcp.pop %v1260
        %v1268 = vmul.f32 1.0, %v1267
        %v1269 = vmax.f32 %v1231, 0.0
        %v1270 = vmax.f32 %v1234, 0.0
        %v1271 = vmax.f32 %v1239, 0.0
        %v1272 = vmax.f32 %v1242, 0.0
        %v1273 = vmul.f32 %v1262, %v1269
        %v1274 = vmul.f32 %v1264, %v1270
        %v1275 = vmul.f32 %v1266, %v1271
        %v1276 = vmul.f32 %v1268, %v1272
        %v1277 = vsub.f32 1.0, %v1262
        %v1278 = vsub.f32 1.0, %v1264
        %v1279 = vsub.f32 1.0, %v1266
        %v1280 = vsub.f32 1.0, %v1268
        %v1313 = vsel %vm1141, %v1003, %v1002
        %v1314 = vsel %vm1143, %v1004, %v1313
        %v1315 = vsel %vm1145, %v1005, %v1314
        %v1316 = vsel %vm1147, %v1006, %v1315
        %v1317 = vsel %vm1149, %v1007, %v1316
        %v1318 = vsel %vm1151, %v1008, %v1317
        %v1319 = vsel %vm1153, %v1009, %v1318
        %v1320 = vsel %vm1141, %v1011, %v1010
        %v1321 = vsel %vm1143, %v1012, %v1320
        %v1322 = vsel %vm1145, %v1013, %v1321
        %v1323 = vsel %vm1147, %v1014, %v1322
        %v1324 = vsel %vm1149, %v1015, %v1323
        %v1325 = vsel %vm1151, %v1016, %v1324
        %v1326 = vsel %vm1153, %v1017, %v1325
        %v1327 = vsel %vm1141, %v1019, %v1018
        %v1328 = vsel %vm1143, %v1020, %v1327
        %v1329 = vsel %vm1145, %v1021, %v1328
        %v1330 = vsel %vm1147, %v1022, %v1329
        %v1331 = vsel %vm1149, %v1023, %v1330
        %v1332 = vsel %vm1151, %v1024, %v1331
        %v1333 = vsel %vm1153, %v1025, %v1332
        %v1334 = vsel %vm1141, %v1027, %v1026
        %v1335 = vsel %vm1143, %v1028, %v1334
        %v1336 = vsel %vm1145, %v1029, %v1335
        %v1337 = vsel %vm1147, %v1030, %v1336
        %v1338 = vsel %vm1149, %v1031, %v1337
        %v1339 = vsel %vm1151, %v1032, %v1338
        %v1340 = vsel %vm1153, %v1033, %v1339
        %v1345 = vmul.f32 %v1277, %v1319
        %v1346 = vmul.f32 %v1278, %v1326
        %v1347 = vmul.f32 %v1279, %v1333
        %v1348 = vmul.f32 %v1280, %v1340
        %v1349 = vadd.f32 %v1273, %v1345
        %v1350 = vadd.f32 %v1274, %v1346
        %v1351 = vadd.f32 %v1275, %v1347
        %v1352 = vadd.f32 %v1276, %v1348
        %v1353 = vsel %vm777, %v1349, 0.0
        %v1354 = vsel %vm777, %v1350, 0.0
        %v1355 = vsel %vm777, %v1351, 0.0
        %v1356 = vsel %vm777, %v1352, 0.0
        %1357 = vst [vmem:[%s348] sm:$0xff] %v1353
        %1358 = vst [vmem:[%s348 + $0x8] sm:$0xff] %v1354
        %1359 = vst [vmem:[%s348 + $0x10] sm:$0xff] %v1355
        %1360 = vst [vmem:[%s348 + $0x18] sm:$0xff] %v1356
        %v1361 = vpack.c.bf16 %v1350, %v1349
        %v1362 = vpack.c.bf16 %v1352, %v1351
        %v1363 = vld [vmem:[%s7] sm:$0xf]
        %v1364 = vld [vmem:[%s7 + $0x4] sm:$0xf]
        %v1365 = vld [vmem:[%s7 + $0x8] sm:$0xf]
        %v1366 = vld [vmem:[%s7 + $0xc] sm:$0xf]
        %v1367 = vld [vmem:[%s8] sm:$0x1]
        %v1369 = vlaneseq
        %v1370 = vshrl.u32 %v1369, 7
        %v1371 = vsub.s32 0, %v1370
        %v1372 = vrot.slane %v1367, %v1371
        %v1378 = vunpack.c.l.b16 %v1363
        %v1379 = vunpack.c.l.b16 %v1364
        %v1380 = vunpack.c.l.b16 %v1365
        %v1381 = vunpack.c.l.b16 %v1366
        %v1382 = vpack.c.b16 %v1379, %v1378
        %v1383 = vpack.c.b16 %v1381, %v1380
        %v1387 = vsel %vm777, %v1361, 0
        %v1390 = vsel %vm777, %v1362, 0
        %1392 = vmatprep.subr.bf16.mxu0 0
        %1393 = vmatpush1.bf16.msra.mxu0 %v1382
        %1394 = vmatprep.subr.bf16.mxu0 0
        %1395 = vmatpush1.bf16.msra.mxu0 %v1383
        %1396 = vmatprep.subr.bf16.mxu0 0
        %1397 = vmatpush1.bf16.msra.mxu0 0
        %1398 = vmatprep.subr.bf16.mxu0 0
        %1399 = vmatpush1.bf16.msra.mxu0 0
        %1400 = vmatprep.subr.bf16.mxu0 0
        %1401 = vmatpush1.bf16.msra.mxu0 0
        %1402 = vmatprep.subr.bf16.mxu0 0
        %1403 = vmatpush1.bf16.msra.mxu0 0
        %1404 = vmatprep.subr.bf16.mxu0 0
        %1405 = vmatpush1.bf16.msra.mxu0 0
        %1406 = vmatprep.subr.bf16.mxu0 0
        %1407 = vmatpush1.bf16.msra.mxu0 0
        %1408 = vmatprep.subr.bf16.mxu0 0
        %1409 = vmatpush1.bf16.msra.mxu0 0
        %1410 = vmatprep.subr.bf16.mxu0 0
        %1411 = vmatpush1.bf16.msra.mxu0 0
        %1412 = vmatprep.subr.bf16.mxu0 0
        %1413 = vmatpush1.bf16.msra.mxu0 0
        %1414 = vmatprep.subr.bf16.mxu0 0
        %1415 = vmatpush1.bf16.msra.mxu0 0
        %1416 = vmatprep.subr.bf16.mxu0 0
        %1417 = vmatpush1.bf16.msra.mxu0 0
        %1418 = vmatprep.subr.bf16.mxu0 0
        %1419 = vmatpush1.bf16.msra.mxu0 0
        %1420 = vmatprep.subr.bf16.mxu0 0
        %1421 = vmatpush1.bf16.msra.mxu0 0
        %1422 = vmatprep.subr.bf16.mxu0 0
        %1423 = vmatpush1.bf16.msra.mxu0 0
        %1424 = vmatprep.mubr.bf16.mxu0 0
        %1425 = vmatmul.mubr.bf16.gmra.mrb[0].mxu0 %v1387
        %v1426 = vpop.f32.mrb[0].mxu0
        %v1427 = vadd.f32 %v1372, %v1426
        %v1428 = vpop.f32.mrb[0].mxu0
        %v1429 = vpop.f32.mrb[0].mxu0
        %v1430 = vadd.f32 %v1372, %v1429
        %v1431 = vpop.f32.mrb[0].mxu0
        %1432 = vmatprep.mubr.bf16.mxu0 0
        %1433 = vmatmul.mubr.bf16.gmra.mrb[0].mxu0 %v1390
        %v1434 = vpop.f32.mrb[0].mxu0
        %v1435 = vadd.f32 %v1372, %v1434
        %v1436 = vpop.f32.mrb[0].mxu0
        %v1437 = vpop.f32.mrb[0].mxu0
        %v1438 = vadd.f32 %v1372, %v1437
        %v1439 = vpop.f32.mrb[0].mxu0
        %1440 = vdwg.mxu0
        %1441 = vst [vmem:[%s355] sm:$0xff] %v1427
        %1442 = vst [vmem:[%s355 + $0x8] sm:$0xff] %v1430
        %1443 = vst [vmem:[%s355 + $0x10] sm:$0xff] %v1435
        %1444 = vst [vmem:[%s355 + $0x18] sm:$0xff] %v1438
        %1445 = vmax.xlane.f32.xlu0 %v1427
        %v1446 = vpop.xlane.xlu0 %1445
        %1447 = vmax.xlane.f32.xlu0 %v1430
        %v1448 = vpop.xlane.xlu0 %1447
        %1449 = vmax.xlane.f32.xlu0 %v1435
        %v1450 = vpop.xlane.xlu0 %1449
        %1451 = vmax.xlane.f32.xlu0 %v1438
        %v1452 = vpop.xlane.xlu0 %1451
        %v1453 = vsub.f32 %v1427, %v1446
        %v1454 = vsub.f32 %v1430, %v1448
        %v1455 = vsub.f32 %v1435, %v1450
        %v1456 = vsub.f32 %v1438, %v1452
        %v1457 = vmul.f32 %v1453, 1.442695
        %v1458 = vpow.pop %v1457
        %v1459 = vmul.f32 %v1454, 1.442695
        %v1460 = vpow.pop %v1459
        %v1461 = vmul.f32 %v1455, 1.442695
        %v1462 = vpow.pop %v1461
        %v1463 = vmul.f32 %v1456, 1.442695
        %v1464 = vpow.pop %v1463
        %1465 = vadd.xlane.f32.xlu0 %v1458
        %v1466 = vpop.xlane.xlu0 %1465
        %1467 = vadd.xlane.f32.xlu0 %v1460
        %v1468 = vpop.xlane.xlu0 %1467
        %1469 = vadd.xlane.f32.xlu0 %v1462
        %v1470 = vpop.xlane.xlu0 %1469
        %1471 = vadd.xlane.f32.xlu0 %v1464
        %v1472 = vpop.xlane.xlu0 %1471
        %v1473 = vlog2.pop %v1466
        %v1474 = vmul.f32 %v1473, 0.6931472
        %v1475 = vlog2.pop %v1468
        %v1476 = vmul.f32 %v1475, 0.6931472
        %v1477 = vlog2.pop %v1470
        %v1478 = vmul.f32 %v1477, 0.6931472
        %v1479 = vlog2.pop %v1472
        %v1480 = vmul.f32 %v1479, 0.6931472
        %v1481 = vsub.f32 %v1453, %v1474
        %v1482 = vsub.f32 %v1454, %v1476
        %v1483 = vsub.f32 %v1455, %v1478
        %v1484 = vsub.f32 %v1456, %v1480
        %1485 = vst [vmem:[%s362] sm:$0xff] %v1481
        %1486 = vst [vmem:[%s362 + $0x8] sm:$0xff] %v1482
        %1487 = vst [vmem:[%s362 + $0x10] sm:$0xff] %v1483
        %1488 = vst [vmem:[%s362 + $0x18] sm:$0xff] %v1484
        %s1489 = sand.u32 %s211, 1
        %s1490 = scalar_lea.sflag [#allocation6], %s1489
        %s1491 = sand.u32 %s211, 1
        %s1492 = smul.addr %s1491, 32
        %s1493 = scalar_lea.vmem [#allocation5], %s1492
        %s1494 = sand.u32 %s35, 1
        %s1495 = scalar_lea.sflag [#allocation8], %s1494
        %s1496 = sand.u32 %s237, 1
        %s1497 = smul.addr %s1496, 32
        %s1498 = scalar_lea.vmem [#allocation7], %s1497
        %s1499 = sand.u32 %s35, 1
        %s1500 = scalar_lea.sflag [#allocation8], %s1499
        %s1501 = sand.u32 %s263, 1
        %s1502 = smul.addr %s1501, 32
        %s1503 = scalar_lea.vmem [#allocation9], %s1502
        // Predicated region
        $region60: #{tpu_custom_call.1} parent=51 // pred_check
          %p1504 = pneg %p221
        $region61: #{tpu_custom_call.1} parent=51 // pred_check_branch
          %1506 = sbr.rel (%p1504) target = $region63
        $region62: #{tpu_custom_call.1} parent=51 // pred_region
          %s1507 = smul.u32 4, %s35
          %s1509 = ssub.s32 512, 512
          %1510 = vsyncadd %s1490, %s1509
          %s1511 = smul.addr %s1507, 128
          %s1512 = scalar_lea.hbm %s9, %s1511
          %s1513 = sshll.u32 %s1493, 4
          %s1514 = int_to_ptr.vmem [resolvable:$true] %s1513
          %1519 = dma.vmem_to_hbm [thread:$0]  %s1514, 512, %s1512, %s1490, 128, 128, 8
        $region63: #{tpu_custom_call.1} parent=51 // pred_fallthru
          _
        // Predicated region
        $region64: #{tpu_custom_call.1} parent=51 // pred_check
          %p1520 = pneg %p247
        $region65: #{tpu_custom_call.1} parent=51 // pred_check_branch
          %1522 = sbr.rel (%p1520) target = $region67
        $region66: #{tpu_custom_call.1} parent=51 // pred_region
          %s1523 = smul.u32 4, %s35
          %s1525 = ssub.s32 512, 512
          %1526 = vsyncadd %s1495, %s1525
          %s1527 = smul.addr %s1523, 128
          %s1528 = scalar_lea.hbm %s10, %s1527
          %s1529 = sshll.u32 %s1498, 4
          %s1530 = int_to_ptr.vmem [resolvable:$true] %s1529
          %1535 = dma.vmem_to_hbm [thread:$0]  %s1530, 512, %s1528, %s1495, 128, 128, 8
        $region67: #{tpu_custom_call.1} parent=51 // pred_fallthru
          _
        // Predicated region
        $region68: #{tpu_custom_call.1} parent=51 // pred_check
          %p1536 = pneg %p273
        $region69: #{tpu_custom_call.1} parent=51 // pred_check_branch
          %1538 = sbr.rel (%p1536) target = $region71
        $region70: #{tpu_custom_call.1} parent=51 // pred_region
          %s1539 = smul.u32 4, %s35
          %s1541 = ssub.s32 512, 512
          %1542 = vsyncadd %s1500, %s1541
          %s1543 = smul.addr %s1539, 128
          %s1544 = scalar_lea.hbm %s11, %s1543
          %s1545 = sshll.u32 %s1503, 4
          %s1546 = int_to_ptr.vmem [resolvable:$true] %s1545
          %1551 = dma.vmem_to_hbm [thread:$0]  %s1546, 512, %s1544, %s1500, 128, 128, 8
        $region71: #{tpu_custom_call.1} parent=51 // pred_fallthru
          _
      $region52: #{tpu_custom_call.1} parent=5 // pred_fallthru
        _
      %p1552 = scmp.le.s32.totalorder 2, %s30
      // Predicated region
      $region72: #{tpu_custom_call.1} parent=5 // pred_check
        %p1553 = pneg %p1552
      $region73: #{tpu_custom_call.1} parent=5 // pred_check_branch
        %1555 = sbr.rel (%p1553) target = $region75
      $region74: #{tpu_custom_call.1} parent=5 // pred_region
        %s1556 = ssub.s32 %s30, 2
        // Predicated region
        $region76: #{tpu_custom_call.1} parent=74 // pred_check
          %p1557 = pneg %p227
        $region77: #{tpu_custom_call.1} parent=74 // pred_check_branch
          %1559 = sbr.rel (%p1557) target = $region79
        $region78: #{tpu_custom_call.1} parent=74 // pred_region
          %s1560 = sand.u32 %s212, 1
          %s1561 = scalar_lea.sflag [#allocation6], %s1560
          %s1562 = sand.u32 %s212, 1
          %s1563 = smul.addr %s1562, 32
          %s1564 = scalar_lea.vmem [#allocation5], %s1563
          %1565 = dma.done %s1561, 512
        $region79: #{tpu_custom_call.1} parent=74 // pred_fallthru
          _
        // Predicated region
        $region80: #{tpu_custom_call.1} parent=74 // pred_check
          %p1566 = pneg %p253
        $region81: #{tpu_custom_call.1} parent=74 // pred_check_branch
          %1568 = sbr.rel (%p1566) target = $region83
        $region82: #{tpu_custom_call.1} parent=74 // pred_region
          %s1569 = sand.u32 %s36, 1
          %s1570 = scalar_lea.sflag [#allocation8], %s1569
          %s1571 = sand.u32 %s238, 1
          %s1572 = smul.addr %s1571, 32
          %s1573 = scalar_lea.vmem [#allocation7], %s1572
          %1574 = dma.done %s1570, 512
        $region83: #{tpu_custom_call.1} parent=74 // pred_fallthru
          _
        // Predicated region
        $region84: #{tpu_custom_call.1} parent=74 // pred_check
          %p1575 = pneg %p279
        $region85: #{tpu_custom_call.1} parent=74 // pred_check_branch
          %1577 = sbr.rel (%p1575) target = $region87
        $region86: #{tpu_custom_call.1} parent=74 // pred_region
          %s1578 = sand.u32 %s36, 1
          %s1579 = scalar_lea.sflag [#allocation8], %s1578
          %s1580 = sand.u32 %s264, 1
          %s1581 = smul.addr %s1580, 32
          %s1582 = scalar_lea.vmem [#allocation9], %s1581
          %1583 = dma.done %s1579, 512
        $region87: #{tpu_custom_call.1} parent=74 // pred_fallthru
          _
      $region75: #{tpu_custom_call.1} parent=5 // pred_fallthru
        _
    $region6: #{tpu_custom_call.1} parent=1 // loop_footer
      %s34 = sadd.s32 1, %s30
    $region7: #{tpu_custom_call.1} parent=1 // loop_footer_branch
      %29 = sbr.rel target = $region3
    $region8: #{tpu_custom_call.1} parent=1 // loop_exit
      _
    %1584 = vsyncpa [#allocation6], 1
    %s1585 = scalar_lea.sflag [#allocation6], 1
    %1586 = vsyncpa %s1585, 1
    %1587 = vsyncpa [#allocation8], 1
    %s1588 = scalar_lea.sflag [#allocation8], 1
    %1589 = vsyncpa %s1588, 1

</llo_original>
